<compile_context>
chip_gen: v7x
topology: tpu7x:2x2x1
jax: 0.10.0
libtpu: 0.0.40
codegen_flags: <defaults>
</compile_context>

<pallas_src>
import functools

import jax
import jax.numpy as jnp
from jax.experimental import pallas as pl
from jax.experimental.pallas import tpu as pltpu

_LANE = 128
_SUBLANE = 8
# Keep all five padded bf16 weights VMEM-resident only if they fit comfortably
# within v7x's 64 MiB per-TC VMEM (weights + activation buffers + headroom).
_FUSED_RESIDENT_BUDGET_BYTES = 40 << 20
_VMEM_LIMIT_CAP_BYTES = 64 << 20  # v7x physical VMEM; plenty of room on v5e/v6e


def _round_up(x: int, m: int) -> int:
    return (x + m - 1) // m * m


# ---------------------------------------------------------------------------
# Kernels
# ---------------------------------------------------------------------------
def _dense(h, w_ref, b_ref, relu):
    # bf16 operands on the MXU, f32 accumulation, f32 bias add.
    acc = jnp.dot(h.astype(w_ref.dtype), w_ref[...],
                  preferred_element_type=jnp.float32) + b_ref[...]
    return jnp.maximum(acc, 0.0) if relu else acc


def mlp_kernel(x_ref,
               w1_ref, b1_ref, w2_ref, b2_ref, w3_ref, b3_ref,
               w4_ref, b4_ref, w5_ref, b5_ref, out_ref):
    """Fused forward for one batch tile: 4x (matmul+bias+ReLU), then matmul+bias."""
    h = x_ref[...]
    h = _dense(h, w1_ref, b1_ref, True)
    h = _dense(h, w2_ref, b2_ref, True)
    h = _dense(h, w3_ref, b3_ref, True)
    h = _dense(h, w4_ref, b4_ref, True)
    out_ref[...] = _dense(h, w5_ref, b5_ref, False).astype(out_ref.dtype)


def linear_kernel(x_ref, w_ref, b_ref, out_ref, *, relu):
    """Single Linear (+ optional ReLU) layer — used by the per-layer fallback."""
    out_ref[...] = _dense(x_ref[...], w_ref, b_ref, relu).astype(out_ref.dtype)


# ---------------------------------------------------------------------------
# Spec / call builders
# ---------------------------------------------------------------------------
def _resident_spec(shape, single_buffer):
    if single_buffer:
        # Constant index_map -> the block never changes across grid steps; a
        # single VMEM buffer suffices (default would be double buffering).
        return pl.BlockSpec(shape, lambda i: (0, 0), pipeline_mode=pl.Buffered(1))
    return pl.BlockSpec(shape, lambda i: (0, 0))


def _nbytes(arrs):
    return sum(int(a.size) * a.dtype.itemsize for a in arrs)


def _vmem_limit(resident_bytes, streaming_bytes):
    need = resident_bytes + streaming_bytes + (8 << 20)  # headroom
    return int(min(max(need, 32 << 20), _VMEM_LIMIT_CAP_BYTES))


def _run_with_weight_buffering(build_fn, args):
    """Prefer single-buffered resident weights; fall back to default buffering."""
    try:
        return build_fn(True)(*args)
    except Exception:
        # TODO(synk): drop this fallback once pl.Buffered(1) is guaranteed on
        # the deployed JAX version.
        return build_fn(False)(*args)


def _build_fused_call(batch_pad, bt, pads, weights, biases):
    in_pad, h_pad, out_pad = pads
    grid = (batch_pad // bt,)

    flops = 2 * batch_pad * (in_pad * h_pad + 3 * h_pad * h_pad + h_pad * out_pad)
    bytes_accessed = (batch_pad * in_pad * 4 + batch_pad * out_pad * 4
                      + _nbytes(weights) + _nbytes(biases))
    resident_bytes = _nbytes(weights) + _nbytes(biases)
    streaming_bytes = 2 * bt * (in_pad + out_pad) * 4 + 4 * bt * h_pad * 4

    def build(single_buffer):
        in_specs = [pl.BlockSpec((bt, in_pad), lambda i: (i, 0))]
        for w, b in zip(weights, biases):
            in_specs.append(_resident_spec(w.shape, single_buffer))
            in_specs.append(_resident_spec(b.shape, single_buffer))
        return pl.pallas_call(
            mlp_kernel,
            out_shape=jax.ShapeDtypeStruct((batch_pad, out_pad), jnp.float32),
            grid=grid,
            in_specs=in_specs,
            out_specs=pl.BlockSpec((bt, out_pad), lambda i: (i, 0)),
            compiler_params=pltpu.CompilerParams(
                dimension_semantics=("parallel",),  # shard batch tiles across TCs
                vmem_limit_bytes=_vmem_limit(
                    resident_bytes if single_buffer else 2 * resident_bytes,
                    streaming_bytes)),
            cost_estimate=pl.CostEstimate(
                flops=flops, transcendentals=0, bytes_accessed=bytes_accessed),
        )

    return build


def _layer_forward(h, w, b, bt, relu):
    """One Linear(+ReLU) layer as its own pallas_call (fallback path)."""
    batch_pad, k_pad = h.shape
    n_pad = w.shape[1]
    grid = (batch_pad // bt,)

    flops = 2 * batch_pad * k_pad * n_pad
    bytes_accessed = batch_pad * k_pad * 4 + batch_pad * n_pad * 4 + _nbytes([w, b])
    resident_bytes = _nbytes([w, b])
    streaming_bytes = 2 * bt * (k_pad + n_pad) * 4

    def build(single_buffer):
        return pl.pallas_call(
            functools.partial(linear_kernel, relu=relu),
            out_shape=jax.ShapeDtypeStruct((batch_pad, n_pad), jnp.float32),
            grid=grid,
            in_specs=[pl.BlockSpec((bt, k_pad), lambda i: (i, 0)),
                      _resident_spec(w.shape, single_buffer),
                      _resident_spec(b.shape, single_buffer)],
            out_specs=pl.BlockSpec((bt, n_pad), lambda i: (i, 0)),
            compiler_params=pltpu.CompilerParams(
                dimension_semantics=("parallel",),
                vmem_limit_bytes=_vmem_limit(
                    resident_bytes if single_buffer else 2 * resident_bytes,
                    streaming_bytes)),
            cost_estimate=pl.CostEstimate(
                flops=flops, transcendentals=0, bytes_accessed=bytes_accessed),
        )

    return _run_with_weight_buffering(build, (h, w, b))


# ---------------------------------------------------------------------------
# Parameter prep + forward wrapper
# ---------------------------------------------------------------------------
def prepare_params(params, *, weight_dtype=jnp.bfloat16):
    """One-time prep: pad feature dims to multiples of 128 and cast weights to
    bf16 (MXU-native).  Zero padding is exact: relu(0 @ W + 0) == 0."""
    in_dim, hidden = params["w1"].shape
    out_dim = params["w5"].shape[1]
    in_pad = _round_up(in_dim, _LANE)
    h_pad = _round_up(hidden, _LANE)
    out_pad = _round_up(out_dim, _LANE)

    def pad2(a, rows, cols):
        r, c = a.shape
        return jnp.pad(a, ((0, rows - r), (0, cols - c)))

    w_dims = [(in_pad, h_pad), (h_pad, h_pad), (h_pad, h_pad),
              (h_pad, h_pad), (h_pad, out_pad)]
    weights, biases = [], []
    for i, (rp, cp) in enumerate(w_dims, start=1):
        weights.append(pad2(params[f"w{i}"], rp, cp).astype(weight_dtype))
        biases.append(pad2(params[f"b{i}"], 1, cp).astype(jnp.float32))
    return {"w": tuple(weights), "b": tuple(biases),
            "dims": (in_dim, hidden, out_dim),
            "pads": (in_pad, h_pad, out_pad)}


def _choose_batch_tile(batch, h_pad, batch_tile=None):
    # Larger tiles amortize per-grid-step overhead for small hidden dims; cap
    # lower for big hidden dims to keep activation VMEM modest.
    cap = batch_tile if batch_tile is not None else (512 if h_pad <= 512 else 256)
    # >= 2 grid steps whenever the batch allows it (megacore sharding on v7x)
    # while bounding batch-padding waste.
    return min(cap, max(_SUBLANE, _round_up(pl.cdiv(batch, 2), _SUBLANE)))


def net_forward(x, prepped, *, batch_tile=None, force_layered=False):
    """Forward pass of `Net`.  x: (batch, input_dim) f32; prepped from prepare_params()."""
    in_dim, _, out_dim = prepped["dims"]
    in_pad, h_pad, out_pad = prepped["pads"]
    weights, biases = prepped["w"], prepped["b"]

    batch = x.shape[0]
    bt = _choose_batch_tile(batch, h_pad, batch_tile)
    batch_pad = _round_up(batch, bt)
    x_p = jnp.pad(x.astype(jnp.float32),
                  ((0, batch_pad - batch), (0, in_pad - in_dim)))

    fused_fits = _nbytes(weights) + _nbytes(biases) <= _FUSED_RESIDENT_BUDGET_BYTES
    if fused_fits and not force_layered:
        build = _build_fused_call(batch_pad, bt, prepped["pads"], weights, biases)
        flat = []
        for w, b in zip(weights, biases):
            flat.extend((w, b))
        out_padded = _run_with_weight_buffering(build, (x_p, *flat))
    else:
        # Per-layer fallback: one resident weight at a time, batch streamed.
        # TODO(synk): for hidden dims where even a single padded weight exceeds
        # VMEM (~4k+ bf16), this needs a K/N-tiled matmul kernel with an f32
        # accumulator scratch.
        h = x_p
        for idx, (w, b) in enumerate(zip(weights, biases)):
            h = _layer_forward(h, w, b, bt, relu=(idx < len(weights) - 1))
        out_padded = h

    return out_padded[:batch, :out_dim]


# ---------------------------------------------------------------------------
# Init + references
# ---------------------------------------------------------------------------
def init_params(key, input_dim, n_units, output_dim):
    """Deterministic init; weights stored (in, out) = transpose of torch Linear.weight."""
    dims = [(input_dim, n_units), (n_units, n_units), (n_units, n_units),
            (n_units, n_units), (n_units, output_dim)]
    params = {}
    for i, (din, dout) in enumerate(dims, start=1):
        key, kw, kb = jax.random.split(key, 3)
        bound = 1.0 / jnp.sqrt(jnp.float32(din))  # torch Linear default range
        params[f"w{i}"] = jax.random.uniform(kw, (din, dout), jnp.float32, -bound, bound)
        params[f"b{i}"] = jax.random.uniform(kb, (1, dout), jnp.float32, -bound, bound)
    return params


def reference_forward(x, params):
    """Pure-JAX f32 reference (unpadded)."""
    h = x
    for i in range(1, 5):
        h = jnp.maximum(h @ params[f"w{i}"] + params[f"b{i}"], 0.0)
    return h @ params["w5"] + params["b5"]


def reference_forward_bf16(x, params):
    """Pure-JAX reference replicating the kernel's bf16-operand / f32-accum math."""
    h = x
    for i in range(1, 6):
        w = params[f"w{i}"].astype(jnp.bfloat16)
        h = jnp.dot(h.astype(jnp.bfloat16), w,
                    preferred_element_type=jnp.float32) + params[f"b{i}"]
        if i < 5:
            h = jnp.maximum(h, 0.0)
    return h


if __name__ == "__main__":
    # TODO(synk): fit()/Adam training loop and the numpy<->torch plumbing in
    # predict() are host-side logic; only the forward pass is a Pallas kernel.
    key = jax.random.PRNGKey(0)

    batch = 8
    input_dim = 4
    n_units = 100      # torch module default
    output_dim = 1

    key, kx = jax.random.split(key)
    x = jax.random.normal(kx, (batch, input_dim), jnp.float32)
    params = init_params(key, input_dim, n_units, output_dim)

    prepped = prepare_params(params)   # one-time pad + bf16 cast (hoisted out of per-call path)

    out = jax.block_until_ready(net_forward(x, prepped))
    assert out.shape == (batch, output_dim)

    ref_bf16 = reference_forward_bf16(x, params)   # matches kernel's bf16 math
    ref_f32 = reference_forward(x, params)
    assert jnp.allclose(out, ref_bf16, atol=2e-3, rtol=2e-3), (out, ref_bf16)
    assert jnp.allclose(out, ref_f32, atol=5e-2, rtol=5e-2), (out, ref_f32)

    # Also exercise the per-layer fallback path (used when resident weights
    # would exceed the v7x-safe VMEM budget).
    out_layered = jax.block_until_ready(net_forward(x, prepped, force_layered=True))
    assert jnp.allclose(out_layered, ref_bf16, atol=2e-3, rtol=2e-3)

    print("KERNEL_OK")
</pallas_src>

<mosaic_0001>
module attributes {stable_mosaic.version = 11 : i64} {
  func.func @mlp_kernel(%arg0: i32, %arg1: memref<8x128xf32, #tpu.memory_space<vmem>>, %arg2: memref<128x128xbf16, #tpu.memory_space<vmem>>, %arg3: memref<1x128xf32, #tpu.memory_space<vmem>>, %arg4: memref<128x128xbf16, #tpu.memory_space<vmem>>, %arg5: memref<1x128xf32, #tpu.memory_space<vmem>>, %arg6: memref<128x128xbf16, #tpu.memory_space<vmem>>, %arg7: memref<1x128xf32, #tpu.memory_space<vmem>>, %arg8: memref<128x128xbf16, #tpu.memory_space<vmem>>, %arg9: memref<1x128xf32, #tpu.memory_space<vmem>>, %arg10: memref<128x128xbf16, #tpu.memory_space<vmem>>, %arg11: memref<1x128xf32, #tpu.memory_space<vmem>>, %arg12: memref<8x128xf32, #tpu.memory_space<vmem>>) attributes {dimension_semantics = [#tpu.dimension_semantics<parallel>], iteration_bounds = array<i64: 1>, scalar_prefetch = 0 : i64, scratch_operands = 0 : i64, tpu.core_type = #tpu.core_type<tc>, window_params = [{transform_indices = @transform_0, window_bounds = array<i64: 8, 128>}, {pipeline_mode = #tpu.pipeline_mode<synchronous>, transform_indices = @transform_1, window_bounds = array<i64: 128, 128>}, {pipeline_mode = #tpu.pipeline_mode<synchronous>, transform_indices = @transform_2, window_bounds = array<i64: 1, 128>}, {pipeline_mode = #tpu.pipeline_mode<synchronous>, transform_indices = @transform_3, window_bounds = array<i64: 128, 128>}, {pipeline_mode = #tpu.pipeline_mode<synchronous>, transform_indices = @transform_4, window_bounds = array<i64: 1, 128>}, {pipeline_mode = #tpu.pipeline_mode<synchronous>, transform_indices = @transform_5, window_bounds = array<i64: 128, 128>}, {pipeline_mode = #tpu.pipeline_mode<synchronous>, transform_indices = @transform_6, window_bounds = array<i64: 1, 128>}, {pipeline_mode = #tpu.pipeline_mode<synchronous>, transform_indices = @transform_7, window_bounds = array<i64: 128, 128>}, {pipeline_mode = #tpu.pipeline_mode<synchronous>, transform_indices = @transform_8, window_bounds = array<i64: 1, 128>}, {pipeline_mode = #tpu.pipeline_mode<synchronous>, transform_indices = @transform_9, window_bounds = array<i64: 128, 128>}, {pipeline_mode = #tpu.pipeline_mode<synchronous>, transform_indices = @transform_10, window_bounds = array<i64: 1, 128>}, {transform_indices = @transform_11, window_bounds = array<i64: 8, 128>}]} {
    %c0 = arith.constant 0 : index
    %c0_0 = arith.constant 0 : index
    %0 = vector.load %arg1[%c0, %c0_0] : memref<8x128xf32, #tpu.memory_space<vmem>>, vector<8x128xf32>
    %1 = arith.truncf %0 : vector<8x128xf32> to vector<8x128xbf16>
    %c0_1 = arith.constant 0 : index
    %c0_2 = arith.constant 0 : index
    %2 = vector.load %arg2[%c0_1, %c0_2] : memref<128x128xbf16, #tpu.memory_space<vmem>>, vector<128x128xbf16>
    %cst = arith.constant dense<0.000000e+00> : vector<8x128xf32>
    %3 = tpu.matmul %1, %2, %cst {dimension_numbers = #tpu.dot_dimension_numbers<[1], [0], [0], [1], [0, 0, 1, 1], [], []>} : vector<8x128xbf16>, vector<128x128xbf16>, vector<8x128xf32> -> vector<8x128xf32>
    %c0_3 = arith.constant 0 : index
    %c0_4 = arith.constant 0 : index
    %4 = vector.load %arg3[%c0_3, %c0_4] : memref<1x128xf32, #tpu.memory_space<vmem>>, vector<1x128xf32>
    %5 = vector.broadcast %4 : vector<1x128xf32> to vector<8x128xf32>
    %6 = arith.addf %3, %5 : vector<8x128xf32>
    %cst_5 = arith.constant 0.000000e+00 : f32
    %7 = vector.broadcast %cst_5 : f32 to vector<8x128xf32>
    %8 = arith.maximumf %6, %7 : vector<8x128xf32>
    %9 = arith.truncf %8 : vector<8x128xf32> to vector<8x128xbf16>
    %c0_6 = arith.constant 0 : index
    %c0_7 = arith.constant 0 : index
    %10 = vector.load %arg4[%c0_6, %c0_7] : memref<128x128xbf16, #tpu.memory_space<vmem>>, vector<128x128xbf16>
    %cst_8 = arith.constant dense<0.000000e+00> : vector<8x128xf32>
    %11 = tpu.matmul %9, %10, %cst_8 {dimension_numbers = #tpu.dot_dimension_numbers<[1], [0], [0], [1], [0, 0, 1, 1], [], []>} : vector<8x128xbf16>, vector<128x128xbf16>, vector<8x128xf32> -> vector<8x128xf32>
    %c0_9 = arith.constant 0 : index
    %c0_10 = arith.constant 0 : index
    %12 = vector.load %arg5[%c0_9, %c0_10] : memref<1x128xf32, #tpu.memory_space<vmem>>, vector<1x128xf32>
    %13 = vector.broadcast %12 : vector<1x128xf32> to vector<8x128xf32>
    %14 = arith.addf %11, %13 : vector<8x128xf32>
    %cst_11 = arith.constant 0.000000e+00 : f32
    %15 = vector.broadcast %cst_11 : f32 to vector<8x128xf32>
    %16 = arith.maximumf %14, %15 : vector<8x128xf32>
    %17 = arith.truncf %16 : vector<8x128xf32> to vector<8x128xbf16>
    %c0_12 = arith.constant 0 : index
    %c0_13 = arith.constant 0 : index
    %18 = vector.load %arg6[%c0_12, %c0_13] : memref<128x128xbf16, #tpu.memory_space<vmem>>, vector<128x128xbf16>
    %cst_14 = arith.constant dense<0.000000e+00> : vector<8x128xf32>
    %19 = tpu.matmul %17, %18, %cst_14 {dimension_numbers = #tpu.dot_dimension_numbers<[1], [0], [0], [1], [0, 0, 1, 1], [], []>} : vector<8x128xbf16>, vector<128x128xbf16>, vector<8x128xf32> -> vector<8x128xf32>
    %c0_15 = arith.constant 0 : index
    %c0_16 = arith.constant 0 : index
    %20 = vector.load %arg7[%c0_15, %c0_16] : memref<1x128xf32, #tpu.memory_space<vmem>>, vector<1x128xf32>
    %21 = vector.broadcast %20 : vector<1x128xf32> to vector<8x128xf32>
    %22 = arith.addf %19, %21 : vector<8x128xf32>
    %cst_17 = arith.constant 0.000000e+00 : f32
    %23 = vector.broadcast %cst_17 : f32 to vector<8x128xf32>
    %24 = arith.maximumf %22, %23 : vector<8x128xf32>
    %25 = arith.truncf %24 : vector<8x128xf32> to vector<8x128xbf16>
    %c0_18 = arith.constant 0 : index
    %c0_19 = arith.constant 0 : index
    %26 = vector.load %arg8[%c0_18, %c0_19] : memref<128x128xbf16, #tpu.memory_space<vmem>>, vector<128x128xbf16>
    %cst_20 = arith.constant dense<0.000000e+00> : vector<8x128xf32>
    %27 = tpu.matmul %25, %26, %cst_20 {dimension_numbers = #tpu.dot_dimension_numbers<[1], [0], [0], [1], [0, 0, 1, 1], [], []>} : vector<8x128xbf16>, vector<128x128xbf16>, vector<8x128xf32> -> vector<8x128xf32>
    %c0_21 = arith.constant 0 : index
    %c0_22 = arith.constant 0 : index
    %28 = vector.load %arg9[%c0_21, %c0_22] : memref<1x128xf32, #tpu.memory_space<vmem>>, vector<1x128xf32>
    %29 = vector.broadcast %28 : vector<1x128xf32> to vector<8x128xf32>
    %30 = arith.addf %27, %29 : vector<8x128xf32>
    %cst_23 = arith.constant 0.000000e+00 : f32
    %31 = vector.broadcast %cst_23 : f32 to vector<8x128xf32>
    %32 = arith.maximumf %30, %31 : vector<8x128xf32>
    %33 = arith.truncf %32 : vector<8x128xf32> to vector<8x128xbf16>
    %c0_24 = arith.constant 0 : index
    %c0_25 = arith.constant 0 : index
    %34 = vector.load %arg10[%c0_24, %c0_25] : memref<128x128xbf16, #tpu.memory_space<vmem>>, vector<128x128xbf16>
    %cst_26 = arith.constant dense<0.000000e+00> : vector<8x128xf32>
    %35 = tpu.matmul %33, %34, %cst_26 {dimension_numbers = #tpu.dot_dimension_numbers<[1], [0], [0], [1], [0, 0, 1, 1], [], []>} : vector<8x128xbf16>, vector<128x128xbf16>, vector<8x128xf32> -> vector<8x128xf32>
    %c0_27 = arith.constant 0 : index
    %c0_28 = arith.constant 0 : index
    %36 = vector.load %arg11[%c0_27, %c0_28] : memref<1x128xf32, #tpu.memory_space<vmem>>, vector<1x128xf32>
    %37 = vector.broadcast %36 : vector<1x128xf32> to vector<8x128xf32>
    %38 = arith.addf %35, %37 : vector<8x128xf32>
    %c0_29 = arith.constant 0 : index
    %c0_30 = arith.constant 0 : index
    %39 = vector.load %arg12[%c0_29, %c0_30] : memref<8x128xf32, #tpu.memory_space<vmem>>, vector<8x128xf32>
    tpu.vector_store %arg12[%c0_29, %c0_30], %38 {strides = array<i32>} : memref<8x128xf32, #tpu.memory_space<vmem>>, vector<8x128xf32>,
    return
  }
  func.func @transform_0(%arg0: i32) -> (i32, i32) {
    %c0_i32 = arith.constant 0 : i32
    %c0_i32_0 = arith.constant 0 : i32
    return %arg0, %c0_i32 : i32, i32
  }
  func.func @transform_1(%arg0: i32) -> (i32, i32) {
    %c0_i32 = arith.constant 0 : i32
    %c0_i32_0 = arith.constant 0 : i32
    %c0_i32_1 = arith.constant 0 : i32
    return %c0_i32, %c0_i32_0 : i32, i32
  }
  func.func @transform_2(%arg0: i32) -> (i32, i32) {
    %c0_i32 = arith.constant 0 : i32
    %c0_i32_0 = arith.constant 0 : i32
    %c0_i32_1 = arith.constant 0 : i32
    return %c0_i32, %c0_i32_0 : i32, i32
  }
  func.func @transform_3(%arg0: i32) -> (i32, i32) {
    %c0_i32 = arith.constant 0 : i32
    %c0_i32_0 = arith.constant 0 : i32
    %c0_i32_1 = arith.constant 0 : i32
    return %c0_i32, %c0_i32_0 : i32, i32
  }
  func.func @transform_4(%arg0: i32) -> (i32, i32) {
    %c0_i32 = arith.constant 0 : i32
    %c0_i32_0 = arith.constant 0 : i32
    %c0_i32_1 = arith.constant 0 : i32
    return %c0_i32, %c0_i32_0 : i32, i32
  }
  func.func @transform_5(%arg0: i32) -> (i32, i32) {
    %c0_i32 = arith.constant 0 : i32
    %c0_i32_0 = arith.constant 0 : i32
    %c0_i32_1 = arith.constant 0 : i32
    return %c0_i32, %c0_i32_0 : i32, i32
  }
  func.func @transform_6(%arg0: i32) -> (i32, i32) {
    %c0_i32 = arith.constant 0 : i32
    %c0_i32_0 = arith.constant 0 : i32
    %c0_i32_1 = arith.constant 0 : i32
    return %c0_i32, %c0_i32_0 : i32, i32
  }
  func.func @transform_7(%arg0: i32) -> (i32, i32) {
    %c0_i32 = arith.constant 0 : i32
    %c0_i32_0 = arith.constant 0 : i32
    %c0_i32_1 = arith.constant 0 : i32
    return %c0_i32, %c0_i32_0 : i32, i32
  }
  func.func @transform_8(%arg0: i32) -> (i32, i32) {
    %c0_i32 = arith.constant 0 : i32
    %c0_i32_0 = arith.constant 0 : i32
    %c0_i32_1 = arith.constant 0 : i32
    return %c0_i32, %c0_i32_0 : i32, i32
  }
  func.func @transform_9(%arg0: i32) -> (i32, i32) {
    %c0_i32 = arith.constant 0 : i32
    %c0_i32_0 = arith.constant 0 : i32
    %c0_i32_1 = arith.constant 0 : i32
    return %c0_i32, %c0_i32_0 : i32, i32
  }
  func.func @transform_10(%arg0: i32) -> (i32, i32) {
    %c0_i32 = arith.constant 0 : i32
    %c0_i32_0 = arith.constant 0 : i32
    %c0_i32_1 = arith.constant 0 : i32
    return %c0_i32, %c0_i32_0 : i32, i32
  }
  func.func @transform_11(%arg0: i32) -> (i32, i32) {
    %c0_i32 = arith.constant 0 : i32
    %c0_i32_0 = arith.constant 0 : i32
    return %arg0, %c0_i32 : i32, i32
  }
}

module attributes {stable_mosaic.version = 11 : i64} {
  func.func @mlp_kernel(%arg0: i32, %arg1: memref<8x128xf32, #tpu.memory_space<vmem>>, %arg2: memref<128x128xbf16, #tpu.memory_space<vmem>>, %arg3: memref<1x128xf32, #tpu.memory_space<vmem>>, %arg4: memref<128x128xbf16, #tpu.memory_space<vmem>>, %arg5: memref<1x128xf32, #tpu.memory_space<vmem>>, %arg6: memref<128x128xbf16, #tpu.memory_space<vmem>>, %arg7: memref<1x128xf32, #tpu.memory_space<vmem>>, %arg8: memref<128x128xbf16, #tpu.memory_space<vmem>>, %arg9: memref<1x128xf32, #tpu.memory_space<vmem>>, %arg10: memref<128x128xbf16, #tpu.memory_space<vmem>>, %arg11: memref<1x128xf32, #tpu.memory_space<vmem>>, %arg12: memref<8x128xf32, #tpu.memory_space<vmem>>) attributes {dimension_semantics = [#tpu.dimension_semantics<parallel>], iteration_bounds = array<i64: 1>, scalar_prefetch = 0 : i64, scratch_operands = 0 : i64, tpu.core_type = #tpu.core_type<tc>, window_params = [{transform_indices = @transform_0, window_bounds = array<i64: 8, 128>}, {pipeline_mode = #tpu.pipeline_mode<synchronous>, transform_indices = @transform_1, window_bounds = array<i64: 128, 128>}, {pipeline_mode = #tpu.pipeline_mode<synchronous>, transform_indices = @transform_2, window_bounds = array<i64: 1, 128>}, {pipeline_mode = #tpu.pipeline_mode<synchronous>, transform_indices = @transform_3, window_bounds = array<i64: 128, 128>}, {pipeline_mode = #tpu.pipeline_mode<synchronous>, transform_indices = @transform_4, window_bounds = array<i64: 1, 128>}, {pipeline_mode = #tpu.pipeline_mode<synchronous>, transform_indices = @transform_5, window_bounds = array<i64: 128, 128>}, {pipeline_mode = #tpu.pipeline_mode<synchronous>, transform_indices = @transform_6, window_bounds = array<i64: 1, 128>}, {pipeline_mode = #tpu.pipeline_mode<synchronous>, transform_indices = @transform_7, window_bounds = array<i64: 128, 128>}, {pipeline_mode = #tpu.pipeline_mode<synchronous>, transform_indices = @transform_8, window_bounds = array<i64: 1, 128>}, {pipeline_mode = #tpu.pipeline_mode<synchronous>, transform_indices = @transform_9, window_bounds = array<i64: 128, 128>}, {pipeline_mode = #tpu.pipeline_mode<synchronous>, transform_indices = @transform_10, window_bounds = array<i64: 1, 128>}, {transform_indices = @transform_11, window_bounds = array<i64: 8, 128>}]} {
    %c0 = arith.constant 0 : index
    %c0_0 = arith.constant 0 : index
    %0 = vector.load %arg1[%c0, %c0_0] : memref<8x128xf32, #tpu.memory_space<vmem>>, vector<8x128xf32>
    %1 = arith.truncf %0 : vector<8x128xf32> to vector<8x128xbf16>
    %c0_1 = arith.constant 0 : index
    %c0_2 = arith.constant 0 : index
    %2 = vector.load %arg2[%c0_1, %c0_2] : memref<128x128xbf16, #tpu.memory_space<vmem>>, vector<128x128xbf16>
    %cst = arith.constant dense<0.000000e+00> : vector<8x128xf32>
    %3 = tpu.matmul %1, %2, %cst {dimension_numbers = #tpu.dot_dimension_numbers<[1], [0], [0], [1], [0, 0, 1, 1], [], []>} : vector<8x128xbf16>, vector<128x128xbf16>, vector<8x128xf32> -> vector<8x128xf32>
    %c0_3 = arith.constant 0 : index
    %c0_4 = arith.constant 0 : index
    %4 = vector.load %arg3[%c0_3, %c0_4] : memref<1x128xf32, #tpu.memory_space<vmem>>, vector<1x128xf32>
    %5 = vector.broadcast %4 : vector<1x128xf32> to vector<8x128xf32>
    %6 = arith.addf %3, %5 : vector<8x128xf32>
    %cst_5 = arith.constant 0.000000e+00 : f32
    %7 = vector.broadcast %cst_5 : f32 to vector<8x128xf32>
    %8 = arith.maximumf %6, %7 : vector<8x128xf32>
    %9 = arith.truncf %8 : vector<8x128xf32> to vector<8x128xbf16>
    %c0_6 = arith.constant 0 : index
    %c0_7 = arith.constant 0 : index
    %10 = vector.load %arg4[%c0_6, %c0_7] : memref<128x128xbf16, #tpu.memory_space<vmem>>, vector<128x128xbf16>
    %cst_8 = arith.constant dense<0.000000e+00> : vector<8x128xf32>
    %11 = tpu.matmul %9, %10, %cst_8 {dimension_numbers = #tpu.dot_dimension_numbers<[1], [0], [0], [1], [0, 0, 1, 1], [], []>} : vector<8x128xbf16>, vector<128x128xbf16>, vector<8x128xf32> -> vector<8x128xf32>
    %c0_9 = arith.constant 0 : index
    %c0_10 = arith.constant 0 : index
    %12 = vector.load %arg5[%c0_9, %c0_10] : memref<1x128xf32, #tpu.memory_space<vmem>>, vector<1x128xf32>
    %13 = vector.broadcast %12 : vector<1x128xf32> to vector<8x128xf32>
    %14 = arith.addf %11, %13 : vector<8x128xf32>
    %cst_11 = arith.constant 0.000000e+00 : f32
    %15 = vector.broadcast %cst_11 : f32 to vector<8x128xf32>
    %16 = arith.maximumf %14, %15 : vector<8x128xf32>
    %17 = arith.truncf %16 : vector<8x128xf32> to vector<8x128xbf16>
    %c0_12 = arith.constant 0 : index
    %c0_13 = arith.constant 0 : index
    %18 = vector.load %arg6[%c0_12, %c0_13] : memref<128x128xbf16, #tpu.memory_space<vmem>>, vector<128x128xbf16>
    %cst_14 = arith.constant dense<0.000000e+00> : vector<8x128xf32>
    %19 = tpu.matmul %17, %18, %cst_14 {dimension_numbers = #tpu.dot_dimension_numbers<[1], [0], [0], [1], [0, 0, 1, 1], [], []>} : vector<8x128xbf16>, vector<128x128xbf16>, vector<8x128xf32> -> vector<8x128xf32>
    %c0_15 = arith.constant 0 : index
    %c0_16 = arith.constant 0 : index
    %20 = vector.load %arg7[%c0_15, %c0_16] : memref<1x128xf32, #tpu.memory_space<vmem>>, vector<1x128xf32>
    %21 = vector.broadcast %20 : vector<1x128xf32> to vector<8x128xf32>
    %22 = arith.addf %19, %21 : vector<8x128xf32>
    %cst_17 = arith.constant 0.000000e+00 : f32
    %23 = vector.broadcast %cst_17 : f32 to vector<8x128xf32>
    %24 = arith.maximumf %22, %23 : vector<8x128xf32>
    %25 = arith.truncf %24 : vector<8x128xf32> to vector<8x128xbf16>
    %c0_18 = arith.constant 0 : index
    %c0_19 = arith.constant 0 : index
    %26 = vector.load %arg8[%c0_18, %c0_19] : memref<128x128xbf16, #tpu.memory_space<vmem>>, vector<128x128xbf16>
    %cst_20 = arith.constant dense<0.000000e+00> : vector<8x128xf32>
    %27 = tpu.matmul %25, %26, %cst_20 {dimension_numbers = #tpu.dot_dimension_numbers<[1], [0], [0], [1], [0, 0, 1, 1], [], []>} : vector<8x128xbf16>, vector<128x128xbf16>, vector<8x128xf32> -> vector<8x128xf32>
    %c0_21 = arith.constant 0 : index
    %c0_22 = arith.constant 0 : index
    %28 = vector.load %arg9[%c0_21, %c0_22] : memref<1x128xf32, #tpu.memory_space<vmem>>, vector<1x128xf32>
    %29 = vector.broadcast %28 : vector<1x128xf32> to vector<8x128xf32>
    %30 = arith.addf %27, %29 : vector<8x128xf32>
    %cst_23 = arith.constant 0.000000e+00 : f32
    %31 = vector.broadcast %cst_23 : f32 to vector<8x128xf32>
    %32 = arith.maximumf %30, %31 : vector<8x128xf32>
    %33 = arith.truncf %32 : vector<8x128xf32> to vector<8x128xbf16>
    %c0_24 = arith.constant 0 : index
    %c0_25 = arith.constant 0 : index
    %34 = vector.load %arg10[%c0_24, %c0_25] : memref<128x128xbf16, #tpu.memory_space<vmem>>, vector<128x128xbf16>
    %cst_26 = arith.constant dense<0.000000e+00> : vector<8x128xf32>
    %35 = tpu.matmul %33, %34, %cst_26 {dimension_numbers = #tpu.dot_dimension_numbers<[1], [0], [0], [1], [0, 0, 1, 1], [], []>} : vector<8x128xbf16>, vector<128x128xbf16>, vector<8x128xf32> -> vector<8x128xf32>
    %c0_27 = arith.constant 0 : index
    %c0_28 = arith.constant 0 : index
    %36 = vector.load %arg11[%c0_27, %c0_28] : memref<1x128xf32, #tpu.memory_space<vmem>>, vector<1x128xf32>
    %37 = vector.broadcast %36 : vector<1x128xf32> to vector<8x128xf32>
    %38 = arith.addf %35, %37 : vector<8x128xf32>
    %c0_29 = arith.constant 0 : index
    %c0_30 = arith.constant 0 : index
    %39 = vector.load %arg12[%c0_29, %c0_30] : memref<8x128xf32, #tpu.memory_space<vmem>>, vector<8x128xf32>
    tpu.vector_store %arg12[%c0_29, %c0_30], %38 {strides = array<i32>} : memref<8x128xf32, #tpu.memory_space<vmem>>, vector<8x128xf32>,
    return
  }
  func.func @transform_0(%arg0: i32) -> (i32, i32) {
    %c0_i32 = arith.constant 0 : i32
    %c0_i32_0 = arith.constant 0 : i32
    return %arg0, %c0_i32 : i32, i32
  }
  func.func @transform_1(%arg0: i32) -> (i32, i32) {
    %c0_i32 = arith.constant 0 : i32
    %c0_i32_0 = arith.constant 0 : i32
    %c0_i32_1 = arith.constant 0 : i32
    return %c0_i32, %c0_i32_0 : i32, i32
  }
  func.func @transform_2(%arg0: i32) -> (i32, i32) {
    %c0_i32 = arith.constant 0 : i32
    %c0_i32_0 = arith.constant 0 : i32
    %c0_i32_1 = arith.constant 0 : i32
    return %c0_i32, %c0_i32_0 : i32, i32
  }
  func.func @transform_3(%arg0: i32) -> (i32, i32) {
    %c0_i32 = arith.constant 0 : i32
    %c0_i32_0 = arith.constant 0 : i32
    %c0_i32_1 = arith.constant 0 : i32
    return %c0_i32, %c0_i32_0 : i32, i32
  }
  func.func @transform_4(%arg0: i32) -> (i32, i32) {
    %c0_i32 = arith.constant 0 : i32
    %c0_i32_0 = arith.constant 0 : i32
    %c0_i32_1 = arith.constant 0 : i32
    return %c0_i32, %c0_i32_0 : i32, i32
  }
  func.func @transform_5(%arg0: i32) -> (i32, i32) {
    %c0_i32 = arith.constant 0 : i32
    %c0_i32_0 = arith.constant 0 : i32
    %c0_i32_1 = arith.constant 0 : i32
    return %c0_i32, %c0_i32_0 : i32, i32
  }
  func.func @transform_6(%arg0: i32) -> (i32, i32) {
    %c0_i32 = arith.constant 0 : i32
    %c0_i32_0 = arith.constant 0 : i32
    %c0_i32_1 = arith.constant 0 : i32
    return %c0_i32, %c0_i32_0 : i32, i32
  }
  func.func @transform_7(%arg0: i32) -> (i32, i32) {
    %c0_i32 = arith.constant 0 : i32
    %c0_i32_0 = arith.constant 0 : i32
    %c0_i32_1 = arith.constant 0 : i32
    return %c0_i32, %c0_i32_0 : i32, i32
  }
  func.func @transform_8(%arg0: i32) -> (i32, i32) {
    %c0_i32 = arith.constant 0 : i32
    %c0_i32_0 = arith.constant 0 : i32
    %c0_i32_1 = arith.constant 0 : i32
    return %c0_i32, %c0_i32_0 : i32, i32
  }
  func.func @transform_9(%arg0: i32) -> (i32, i32) {
    %c0_i32 = arith.constant 0 : i32
    %c0_i32_0 = arith.constant 0 : i32
    %c0_i32_1 = arith.constant 0 : i32
    return %c0_i32, %c0_i32_0 : i32, i32
  }
  func.func @transform_10(%arg0: i32) -> (i32, i32) {
    %c0_i32 = arith.constant 0 : i32
    %c0_i32_0 = arith.constant 0 : i32
    %c0_i32_1 = arith.constant 0 : i32
    return %c0_i32, %c0_i32_0 : i32, i32
  }
  func.func @transform_11(%arg0: i32) -> (i32, i32) {
    %c0_i32 = arith.constant 0 : i32
    %c0_i32_0 = arith.constant 0 : i32
    return %arg0, %c0_i32 : i32, i32
  }
}

</mosaic_0001>

<llo_original>
// kernel: tpu_custom_call.1
$region0: #{tpu_custom_call.1}
  #allocation0 [shape = 'u32[]', space=smem, size = 0x4, offset = 0x4, fixed_abs, tag = 'smem constant byte address 0x4 - core index']
  #allocation1 [shape = 'u32[144,128]{1,0:T(1,128)}', space=vmem, size = 0x12000, scoped, tag = 'internal scratch']
  %s0 = inlined_call_operand.hbm [shape: f32[8,128], index: 0, kind: input, shape index: {}]
  %s1 = inlined_call_operand.hbm [shape: bf16[128,128], index: 1, kind: input, shape index: {}]
  %s2 = inlined_call_operand.vmem [shape: f32[1,128], index: 2, kind: input, shape index: {}]
  %s3 = inlined_call_operand.hbm [shape: bf16[128,128], index: 3, kind: input, shape index: {}]
  %s4 = inlined_call_operand.vmem [shape: f32[1,128], index: 4, kind: input, shape index: {}]
  %s5 = inlined_call_operand.hbm [shape: bf16[128,128], index: 5, kind: input, shape index: {}]
  %s6 = inlined_call_operand.vmem [shape: f32[1,128], index: 6, kind: input, shape index: {}]
  %s7 = inlined_call_operand.hbm [shape: bf16[128,128], index: 7, kind: input, shape index: {}]
  %s8 = inlined_call_operand.vmem [shape: f32[1,128], index: 8, kind: input, shape index: {}]
  %s9 = inlined_call_operand.hbm [shape: bf16[128,128], index: 9, kind: input, shape index: {}]
  %s10 = inlined_call_operand.vmem [shape: f32[1,128], index: 10, kind: input, shape index: {}]
  %s11 = inlined_call_operand.hbm [shape: f32[8,128], index: 11, kind: output, shape index: {}]
  %s12 = sld [smem:[#allocation0]]
  $region78: #{tpu_custom_call.1} parent=0
    _
  %s14 = ssub.s32 1, %s12
  %s15 = scalar_select 0, %s14, %s12
  $region1: #{tpu_custom_call.1} parent=0
    #allocation2 [shape = 'u8[4096]{0}', space=vmem, size = 0x1000, scoped, tag = 'input window, operand 0, single buffered']
    #allocation3 [shape = 's32[1]{0}', space=sflag, size = 0x4, scoped, tag = 'scoped memory for tpu_custom_call.1']
    #allocation4 [shape = 's32[1]{0}', space=sflag, size = 0x4, scoped, tag = 'scoped memory for tpu_custom_call.1']
    #allocation5 [shape = 'u8[32768]{0}', space=vmem, size = 0x8000, scoped, tag = 'input window, operand 1, single buffered']
    #allocation6 [shape = 's32[1]{0}', space=sflag, size = 0x4, scoped, tag = 'scoped memory for tpu_custom_call.1']
    #allocation7 [shape = 'u8[32768]{0}', space=vmem, size = 0x8000, scoped, tag = 'input window, operand 3, single buffered']
    #allocation8 [shape = 'u8[32768]{0}', space=vmem, size = 0x8000, scoped, tag = 'input window, operand 5, single buffered']
    #allocation9 [shape = 's32[1]{0}', space=sflag, size = 0x4, scoped, tag = 'scoped memory for tpu_custom_call.1']
    #allocation10 [shape = 'u8[32768]{0}', space=vmem, size = 0x8000, scoped, tag = 'input window, operand 7, single buffered']
    #allocation11 [shape = 'u8[32768]{0}', space=vmem, size = 0x8000, scoped, tag = 'input window, operand 9, single buffered']
    #allocation12 [shape = 's32[1]{0}', space=sflag, size = 0x4, scoped, tag = 'scoped memory for tpu_custom_call.1']
    #allocation13 [shape = 'u8[4096]{0}', space=vmem, size = 0x1000, scoped, tag = 'output window, operand 0, single buffered']
    %16 = vsyncpa [#allocation3], 0
    %17 = vsyncpa [#allocation6], 0
    %18 = vsyncpa [#allocation9], 0
    %19 = vsyncpa [#allocation12], 0
    %20 = vsyncpa [#allocation4], 0
    // Predicated region
    $region2: #{tpu_custom_call.1} parent=1 // pred_check
      _
    $region3: #{tpu_custom_call.1} parent=1 // pred_check_branch
      %22 = sbr.rel (0) target = $region5
    $region4: #{tpu_custom_call.1} parent=1 // pred_region
      %s24 = ssub.s32 128, 128
      %25 = vsyncadd [#allocation3], %s24
      %s27 = sshll.u32 [#allocation2], 4
      %s28 = int_to_ptr.vmem [resolvable:$true] %s27
      %30 = dma.hbm_to_vmem [thread:$0]  %s0, 128, %s28, [#allocation3]
    $region5: #{tpu_custom_call.1} parent=1 // pred_fallthru
      _
    // Predicated region
    $region6: #{tpu_custom_call.1} parent=1 // pred_check
      _
    $region7: #{tpu_custom_call.1} parent=1 // pred_check_branch
      %32 = sbr.rel (0) target = $region9
    $region8: #{tpu_custom_call.1} parent=1 // pred_region
      %s34 = ssub.s32 1024, 1024
      %35 = vsyncadd [#allocation6], %s34
      %s36 = sshll.u32 [#allocation5], 4
      %s37 = int_to_ptr.vmem [resolvable:$true] %s36
      %42 = dma.hbm_to_vmem [thread:$0]  %s1, 1024, %s37, [#allocation6], 64, 64, 4
    $region9: #{tpu_custom_call.1} parent=1 // pred_fallthru
      _
    // Predicated region
    $region10: #{tpu_custom_call.1} parent=1 // pred_check
      _
    $region11: #{tpu_custom_call.1} parent=1 // pred_check_branch
      %44 = sbr.rel (0) target = $region13
    $region12: #{tpu_custom_call.1} parent=1 // pred_region
      _
    $region13: #{tpu_custom_call.1} parent=1 // pred_fallthru
      _
    // Predicated region
    $region14: #{tpu_custom_call.1} parent=1 // pred_check
      _
    $region15: #{tpu_custom_call.1} parent=1 // pred_check_branch
      %46 = sbr.rel (0) target = $region17
    $region16: #{tpu_custom_call.1} parent=1 // pred_region
      %s48 = ssub.s32 1024, 1024
      %49 = vsyncadd [#allocation6], %s48
      %s50 = sshll.u32 [#allocation7], 4
      %s51 = int_to_ptr.vmem [resolvable:$true] %s50
      %56 = dma.hbm_to_vmem [thread:$0]  %s3, 1024, %s51, [#allocation6], 64, 64, 4
    $region17: #{tpu_custom_call.1} parent=1 // pred_fallthru
      _
    // Predicated region
    $region18: #{tpu_custom_call.1} parent=1 // pred_check
      _
    $region19: #{tpu_custom_call.1} parent=1 // pred_check_branch
      %58 = sbr.rel (0) target = $region21
    $region20: #{tpu_custom_call.1} parent=1 // pred_region
      _
    $region21: #{tpu_custom_call.1} parent=1 // pred_fallthru
      _
    // Predicated region
    $region22: #{tpu_custom_call.1} parent=1 // pred_check
      _
    $region23: #{tpu_custom_call.1} parent=1 // pred_check_branch
      %60 = sbr.rel (0) target = $region25
    $region24: #{tpu_custom_call.1} parent=1 // pred_region
      %s62 = ssub.s32 1024, 1024
      %63 = vsyncadd [#allocation9], %s62
      %s64 = sshll.u32 [#allocation8], 4
      %s65 = int_to_ptr.vmem [resolvable:$true] %s64
      %70 = dma.hbm_to_vmem [thread:$0]  %s5, 1024, %s65, [#allocation9], 64, 64, 4
    $region25: #{tpu_custom_call.1} parent=1 // pred_fallthru
      _
    // Predicated region
    $region26: #{tpu_custom_call.1} parent=1 // pred_check
      _
    $region27: #{tpu_custom_call.1} parent=1 // pred_check_branch
      %72 = sbr.rel (0) target = $region29
    $region28: #{tpu_custom_call.1} parent=1 // pred_region
      _
    $region29: #{tpu_custom_call.1} parent=1 // pred_fallthru
      _
    // Predicated region
    $region30: #{tpu_custom_call.1} parent=1 // pred_check
      _
    $region31: #{tpu_custom_call.1} parent=1 // pred_check_branch
      %74 = sbr.rel (0) target = $region33
    $region32: #{tpu_custom_call.1} parent=1 // pred_region
      %s76 = ssub.s32 1024, 1024
      %77 = vsyncadd [#allocation9], %s76
      %s78 = sshll.u32 [#allocation10], 4
      %s79 = int_to_ptr.vmem [resolvable:$true] %s78
      %84 = dma.hbm_to_vmem [thread:$0]  %s7, 1024, %s79, [#allocation9], 64, 64, 4
    $region33: #{tpu_custom_call.1} parent=1 // pred_fallthru
      _
    // Predicated region
    $region34: #{tpu_custom_call.1} parent=1 // pred_check
      _
    $region35: #{tpu_custom_call.1} parent=1 // pred_check_branch
      %86 = sbr.rel (0) target = $region37
    $region36: #{tpu_custom_call.1} parent=1 // pred_region
      _
    $region37: #{tpu_custom_call.1} parent=1 // pred_fallthru
      _
    // Predicated region
    $region38: #{tpu_custom_call.1} parent=1 // pred_check
      _
    $region39: #{tpu_custom_call.1} parent=1 // pred_check_branch
      %88 = sbr.rel (0) target = $region41
    $region40: #{tpu_custom_call.1} parent=1 // pred_region
      %s90 = ssub.s32 1024, 1024
      %91 = vsyncadd [#allocation12], %s90
      %s92 = sshll.u32 [#allocation11], 4
      %s93 = int_to_ptr.vmem [resolvable:$true] %s92
      %98 = dma.hbm_to_vmem [thread:$0]  %s9, 1024, %s93, [#allocation12], 64, 64, 4
    $region41: #{tpu_custom_call.1} parent=1 // pred_fallthru
      _
    // Predicated region
    $region42: #{tpu_custom_call.1} parent=1 // pred_check
      _
    $region43: #{tpu_custom_call.1} parent=1 // pred_check_branch
      %100 = sbr.rel (0) target = $region45
    $region44: #{tpu_custom_call.1} parent=1 // pred_region
      _
    $region45: #{tpu_custom_call.1} parent=1 // pred_fallthru
      _
    // Predicated region
    $region46: #{tpu_custom_call.1} parent=1 // pred_check
      _
    $region47: #{tpu_custom_call.1} parent=1 // pred_check_branch
      %102 = sbr.rel (0) target = $region49
    $region48: #{tpu_custom_call.1} parent=1 // pred_region
      %103 = dma.done [#allocation3], 128
    $region49: #{tpu_custom_call.1} parent=1 // pred_fallthru
      _
    // Predicated region
    $region50: #{tpu_custom_call.1} parent=1 // pred_check
      _
    $region51: #{tpu_custom_call.1} parent=1 // pred_check_branch
      %105 = sbr.rel (0) target = $region53
    $region52: #{tpu_custom_call.1} parent=1 // pred_region
      %106 = dma.done [#allocation6], 1024
    $region53: #{tpu_custom_call.1} parent=1 // pred_fallthru
      _
    // Predicated region
    $region54: #{tpu_custom_call.1} parent=1 // pred_check
      _
    $region55: #{tpu_custom_call.1} parent=1 // pred_check_branch
      %108 = sbr.rel (0) target = $region57
    $region56: #{tpu_custom_call.1} parent=1 // pred_region
      %109 = dma.done [#allocation6], 1024
    $region57: #{tpu_custom_call.1} parent=1 // pred_fallthru
      _
    // Predicated region
    $region58: #{tpu_custom_call.1} parent=1 // pred_check
      _
    $region59: #{tpu_custom_call.1} parent=1 // pred_check_branch
      %111 = sbr.rel (0) target = $region61
    $region60: #{tpu_custom_call.1} parent=1 // pred_region
      %112 = dma.done [#allocation9], 1024
    $region61: #{tpu_custom_call.1} parent=1 // pred_fallthru
      _
    // Predicated region
    $region62: #{tpu_custom_call.1} parent=1 // pred_check
      _
    $region63: #{tpu_custom_call.1} parent=1 // pred_check_branch
      %114 = sbr.rel (0) target = $region65
    $region64: #{tpu_custom_call.1} parent=1 // pred_region
      %115 = dma.done [#allocation9], 1024
    $region65: #{tpu_custom_call.1} parent=1 // pred_fallthru
      _
    // Predicated region
    $region66: #{tpu_custom_call.1} parent=1 // pred_check
      _
    $region67: #{tpu_custom_call.1} parent=1 // pred_check_branch
      %117 = sbr.rel (0) target = $region69
    $region68: #{tpu_custom_call.1} parent=1 // pred_region
      %118 = dma.done [#allocation12], 1024
    $region69: #{tpu_custom_call.1} parent=1 // pred_fallthru
      _
    %v120 = vld [vmem:[#allocation2] sm:$0xff]
    %v121 = vpack.c.bf16 %v120, %v120
    %v122 = vld [vmem:[#allocation5] sm:$0xf]
    %v123 = vld [vmem:[#allocation5 + $0x4] sm:$0xf]
    %v124 = vld [vmem:[#allocation5 + $0x8] sm:$0xf]
    %v125 = vld [vmem:[#allocation5 + $0xc] sm:$0xf]
    %v126 = vld [vmem:[#allocation5 + $0x10] sm:$0xf]
    %v127 = vld [vmem:[#allocation5 + $0x14] sm:$0xf]
    %v128 = vld [vmem:[#allocation5 + $0x18] sm:$0xf]
    %v129 = vld [vmem:[#allocation5 + $0x1c] sm:$0xf]
    %v130 = vld [vmem:[#allocation5 + $0x20] sm:$0xf]
    %v131 = vld [vmem:[#allocation5 + $0x24] sm:$0xf]
    %v132 = vld [vmem:[#allocation5 + $0x28] sm:$0xf]
    %v133 = vld [vmem:[#allocation5 + $0x2c] sm:$0xf]
    %v134 = vld [vmem:[#allocation5 + $0x30] sm:$0xf]
    %v135 = vld [vmem:[#allocation5 + $0x34] sm:$0xf]
    %v136 = vld [vmem:[#allocation5 + $0x38] sm:$0xf]
    %v137 = vld [vmem:[#allocation5 + $0x3c] sm:$0xf]
    %v138 = vld [vmem:[%s2] sm:$0x1]
    %v140 = vlaneseq
    %v141 = vshrl.u32 %v140, 7
    %v142 = vsub.s32 0, %v141
    %v143 = vrot.slane %v138, %v142
    %v161 = vunpack.c.l.b16 %v122
    %v162 = vunpack.c.l.b16 %v123
    %v163 = vunpack.c.l.b16 %v124
    %v164 = vunpack.c.l.b16 %v125
    %v165 = vunpack.c.l.b16 %v126
    %v166 = vunpack.c.l.b16 %v127
    %v167 = vunpack.c.l.b16 %v128
    %v168 = vunpack.c.l.b16 %v129
    %v169 = vunpack.c.l.b16 %v130
    %v170 = vunpack.c.l.b16 %v131
    %v171 = vunpack.c.l.b16 %v132
    %v172 = vunpack.c.l.b16 %v133
    %v173 = vunpack.c.l.b16 %v134
    %v174 = vunpack.c.l.b16 %v135
    %v175 = vunpack.c.l.b16 %v136
    %v176 = vunpack.c.l.b16 %v137
    %v177 = vpack.c.b16 %v162, %v161
    %v178 = vpack.c.b16 %v164, %v163
    %v179 = vpack.c.b16 %v166, %v165
    %v180 = vpack.c.b16 %v168, %v167
    %v181 = vpack.c.b16 %v170, %v169
    %v182 = vpack.c.b16 %v172, %v171
    %v183 = vpack.c.b16 %v174, %v173
    %v184 = vpack.c.b16 %v176, %v175
    %193 = vmatprep.subr.bf16.mxu0 0
    %194 = vmatpush1.bf16.msra.mxu0 %v177
    %195 = vmatprep.subr.bf16.mxu0 0
    %196 = vmatpush1.bf16.msra.mxu0 %v178
    %197 = vmatprep.subr.bf16.mxu0 0
    %198 = vmatpush1.bf16.msra.mxu0 %v179
    %199 = vmatprep.subr.bf16.mxu0 0
    %200 = vmatpush1.bf16.msra.mxu0 %v180
    %201 = vmatprep.subr.bf16.mxu0 0
    %202 = vmatpush1.bf16.msra.mxu0 %v181
    %203 = vmatprep.subr.bf16.mxu0 0
    %204 = vmatpush1.bf16.msra.mxu0 %v182
    %205 = vmatprep.subr.bf16.mxu0 0
    %206 = vmatpush1.bf16.msra.mxu0 %v183
    %207 = vmatprep.subr.bf16.mxu0 0
    %208 = vmatpush1.bf16.msra.mxu0 %v184
    %209 = vmatprep.subr.bf16.mxu0 0
    %210 = vmatpush1.bf16.msra.mxu0 0
    %211 = vmatprep.subr.bf16.mxu0 0
    %212 = vmatpush1.bf16.msra.mxu0 0
    %213 = vmatprep.subr.bf16.mxu0 0
    %214 = vmatpush1.bf16.msra.mxu0 0
    %215 = vmatprep.subr.bf16.mxu0 0
    %216 = vmatpush1.bf16.msra.mxu0 0
    %217 = vmatprep.subr.bf16.mxu0 0
    %218 = vmatpush1.bf16.msra.mxu0 0
    %219 = vmatprep.subr.bf16.mxu0 0
    %220 = vmatpush1.bf16.msra.mxu0 0
    %221 = vmatprep.subr.bf16.mxu0 0
    %222 = vmatpush1.bf16.msra.mxu0 0
    %223 = vmatprep.subr.bf16.mxu0 0
    %224 = vmatpush1.bf16.msra.mxu0 0
    %225 = vmatprep.mubr.bf16.mxu0 0
    %226 = vmatmul.mubr.bf16.gmra.mrb[0].mxu0 %v121
    %v227 = vpop.f32.mrb[0].mxu0
    %v228 = vadd.f32 %v143, %v227
    %v229 = vpop.f32.mrb[0].mxu0
    %v230 = vpop.f32.mrb[0].mxu0
    %v231 = vpop.f32.mrb[0].mxu0
    %232 = vdwg.mxu0
    %v233 = vmax.f32 %v228, 0.0
    %v234 = vpack.c.bf16 %v233, %v233
    %v235 = vld [vmem:[#allocation7] sm:$0xf]
    %v236 = vld [vmem:[#allocation7 + $0x4] sm:$0xf]
    %v237 = vld [vmem:[#allocation7 + $0x8] sm:$0xf]
    %v238 = vld [vmem:[#allocation7 + $0xc] sm:$0xf]
    %v239 = vld [vmem:[#allocation7 + $0x10] sm:$0xf]
    %v240 = vld [vmem:[#allocation7 + $0x14] sm:$0xf]
    %v241 = vld [vmem:[#allocation7 + $0x18] sm:$0xf]
    %v242 = vld [vmem:[#allocation7 + $0x1c] sm:$0xf]
    %v243 = vld [vmem:[#allocation7 + $0x20] sm:$0xf]
    %v244 = vld [vmem:[#allocation7 + $0x24] sm:$0xf]
    %v245 = vld [vmem:[#allocation7 + $0x28] sm:$0xf]
    %v246 = vld [vmem:[#allocation7 + $0x2c] sm:$0xf]
    %v247 = vld [vmem:[#allocation7 + $0x30] sm:$0xf]
    %v248 = vld [vmem:[#allocation7 + $0x34] sm:$0xf]
    %v249 = vld [vmem:[#allocation7 + $0x38] sm:$0xf]
    %v250 = vld [vmem:[#allocation7 + $0x3c] sm:$0xf]
    %v251 = vld [vmem:[%s4] sm:$0x1]
    %v253 = vlaneseq
    %v254 = vshrl.u32 %v253, 7
    %v255 = vsub.s32 0, %v254
    %v256 = vrot.slane %v251, %v255
    %v274 = vunpack.c.l.b16 %v235
    %v275 = vunpack.c.l.b16 %v236
    %v276 = vunpack.c.l.b16 %v237
    %v277 = vunpack.c.l.b16 %v238
    %v278 = vunpack.c.l.b16 %v239
    %v279 = vunpack.c.l.b16 %v240
    %v280 = vunpack.c.l.b16 %v241
    %v281 = vunpack.c.l.b16 %v242
    %v282 = vunpack.c.l.b16 %v243
    %v283 = vunpack.c.l.b16 %v244
    %v284 = vunpack.c.l.b16 %v245
    %v285 = vunpack.c.l.b16 %v246
    %v286 = vunpack.c.l.b16 %v247
    %v287 = vunpack.c.l.b16 %v248
    %v288 = vunpack.c.l.b16 %v249
    %v289 = vunpack.c.l.b16 %v250
    %v290 = vpack.c.b16 %v275, %v274
    %v291 = vpack.c.b16 %v277, %v276
    %v292 = vpack.c.b16 %v279, %v278
    %v293 = vpack.c.b16 %v281, %v280
    %v294 = vpack.c.b16 %v283, %v282
    %v295 = vpack.c.b16 %v285, %v284
    %v296 = vpack.c.b16 %v287, %v286
    %v297 = vpack.c.b16 %v289, %v288
    %306 = vmatprep.subr.bf16.mxu0 0
    %307 = vmatpush1.bf16.msra.mxu0 %v290
    %308 = vmatprep.subr.bf16.mxu0 0
    %309 = vmatpush1.bf16.msra.mxu0 %v291
    %310 = vmatprep.subr.bf16.mxu0 0
    %311 = vmatpush1.bf16.msra.mxu0 %v292
    %312 = vmatprep.subr.bf16.mxu0 0
    %313 = vmatpush1.bf16.msra.mxu0 %v293
    %314 = vmatprep.subr.bf16.mxu0 0
    %315 = vmatpush1.bf16.msra.mxu0 %v294
    %316 = vmatprep.subr.bf16.mxu0 0
    %317 = vmatpush1.bf16.msra.mxu0 %v295
    %318 = vmatprep.subr.bf16.mxu0 0
    %319 = vmatpush1.bf16.msra.mxu0 %v296
    %320 = vmatprep.subr.bf16.mxu0 0
    %321 = vmatpush1.bf16.msra.mxu0 %v297
    %322 = vmatprep.subr.bf16.mxu0 0
    %323 = vmatpush1.bf16.msra.mxu0 0
    %324 = vmatprep.subr.bf16.mxu0 0
    %325 = vmatpush1.bf16.msra.mxu0 0
    %326 = vmatprep.subr.bf16.mxu0 0
    %327 = vmatpush1.bf16.msra.mxu0 0
    %328 = vmatprep.subr.bf16.mxu0 0
    %329 = vmatpush1.bf16.msra.mxu0 0
    %330 = vmatprep.subr.bf16.mxu0 0
    %331 = vmatpush1.bf16.msra.mxu0 0
    %332 = vmatprep.subr.bf16.mxu0 0
    %333 = vmatpush1.bf16.msra.mxu0 0
    %334 = vmatprep.subr.bf16.mxu0 0
    %335 = vmatpush1.bf16.msra.mxu0 0
    %336 = vmatprep.subr.bf16.mxu0 0
    %337 = vmatpush1.bf16.msra.mxu0 0
    %338 = vmatprep.mubr.bf16.mxu0 0
    %339 = vmatmul.mubr.bf16.gmra.mrb[0].mxu0 %v234
    %v340 = vpop.f32.mrb[0].mxu0
    %v341 = vadd.f32 %v256, %v340
    %v342 = vpop.f32.mrb[0].mxu0
    %v343 = vpop.f32.mrb[0].mxu0
    %v344 = vpop.f32.mrb[0].mxu0
    %345 = vdwg.mxu0
    %v346 = vmax.f32 %v341, 0.0
    %v347 = vpack.c.bf16 %v346, %v346
    %v348 = vld [vmem:[#allocation8] sm:$0xf]
    %v349 = vld [vmem:[#allocation8 + $0x4] sm:$0xf]
    %v350 = vld [vmem:[#allocation8 + $0x8] sm:$0xf]
    %v351 = vld [vmem:[#allocation8 + $0xc] sm:$0xf]
    %v352 = vld [vmem:[#allocation8 + $0x10] sm:$0xf]
    %v353 = vld [vmem:[#allocation8 + $0x14] sm:$0xf]
    %v354 = vld [vmem:[#allocation8 + $0x18] sm:$0xf]
    %v355 = vld [vmem:[#allocation8 + $0x1c] sm:$0xf]
    %v356 = vld [vmem:[#allocation8 + $0x20] sm:$0xf]
    %v357 = vld [vmem:[#allocation8 + $0x24] sm:$0xf]
    %v358 = vld [vmem:[#allocation8 + $0x28] sm:$0xf]
    %v359 = vld [vmem:[#allocation8 + $0x2c] sm:$0xf]
    %v360 = vld [vmem:[#allocation8 + $0x30] sm:$0xf]
    %v361 = vld [vmem:[#allocation8 + $0x34] sm:$0xf]
    %v362 = vld [vmem:[#allocation8 + $0x38] sm:$0xf]
    %v363 = vld [vmem:[#allocation8 + $0x3c] sm:$0xf]
    %v364 = vld [vmem:[%s6] sm:$0x1]
    %v366 = vlaneseq
    %v367 = vshrl.u32 %v366, 7
    %v368 = vsub.s32 0, %v367
    %v369 = vrot.slane %v364, %v368
    %v387 = vunpack.c.l.b16 %v348
    %v388 = vunpack.c.l.b16 %v349
    %v389 = vunpack.c.l.b16 %v350
    %v390 = vunpack.c.l.b16 %v351
    %v391 = vunpack.c.l.b16 %v352
    %v392 = vunpack.c.l.b16 %v353
    %v393 = vunpack.c.l.b16 %v354
    %v394 = vunpack.c.l.b16 %v355
    %v395 = vunpack.c.l.b16 %v356
    %v396 = vunpack.c.l.b16 %v357
    %v397 = vunpack.c.l.b16 %v358
    %v398 = vunpack.c.l.b16 %v359
    %v399 = vunpack.c.l.b16 %v360
    %v400 = vunpack.c.l.b16 %v361
    %v401 = vunpack.c.l.b16 %v362
    %v402 = vunpack.c.l.b16 %v363
    %v403 = vpack.c.b16 %v388, %v387
    %v404 = vpack.c.b16 %v390, %v389
    %v405 = vpack.c.b16 %v392, %v391
    %v406 = vpack.c.b16 %v394, %v393
    %v407 = vpack.c.b16 %v396, %v395
    %v408 = vpack.c.b16 %v398, %v397
    %v409 = vpack.c.b16 %v400, %v399
    %v410 = vpack.c.b16 %v402, %v401
    %419 = vmatprep.subr.bf16.mxu0 0
    %420 = vmatpush1.bf16.msra.mxu0 %v403
    %421 = vmatprep.subr.bf16.mxu0 0
    %422 = vmatpush1.bf16.msra.mxu0 %v404
    %423 = vmatprep.subr.bf16.mxu0 0
    %424 = vmatpush1.bf16.msra.mxu0 %v405
    %425 = vmatprep.subr.bf16.mxu0 0
    %426 = vmatpush1.bf16.msra.mxu0 %v406
    %427 = vmatprep.subr.bf16.mxu0 0
    %428 = vmatpush1.bf16.msra.mxu0 %v407
    %429 = vmatprep.subr.bf16.mxu0 0
    %430 = vmatpush1.bf16.msra.mxu0 %v408
    %431 = vmatprep.subr.bf16.mxu0 0
    %432 = vmatpush1.bf16.msra.mxu0 %v409
    %433 = vmatprep.subr.bf16.mxu0 0
    %434 = vmatpush1.bf16.msra.mxu0 %v410
    %435 = vmatprep.subr.bf16.mxu0 0
    %436 = vmatpush1.bf16.msra.mxu0 0
    %437 = vmatprep.subr.bf16.mxu0 0
    %438 = vmatpush1.bf16.msra.mxu0 0
    %439 = vmatprep.subr.bf16.mxu0 0
    %440 = vmatpush1.bf16.msra.mxu0 0
    %441 = vmatprep.subr.bf16.mxu0 0
    %442 = vmatpush1.bf16.msra.mxu0 0
    %443 = vmatprep.subr.bf16.mxu0 0
    %444 = vmatpush1.bf16.msra.mxu0 0
    %445 = vmatprep.subr.bf16.mxu0 0
    %446 = vmatpush1.bf16.msra.mxu0 0
    %447 = vmatprep.subr.bf16.mxu0 0
    %448 = vmatpush1.bf16.msra.mxu0 0
    %449 = vmatprep.subr.bf16.mxu0 0
    %450 = vmatpush1.bf16.msra.mxu0 0
    %451 = vmatprep.mubr.bf16.mxu0 0
    %452 = vmatmul.mubr.bf16.gmra.mrb[0].mxu0 %v347
    %v453 = vpop.f32.mrb[0].mxu0
    %v454 = vadd.f32 %v369, %v453
    %v455 = vpop.f32.mrb[0].mxu0
    %v456 = vpop.f32.mrb[0].mxu0
    %v457 = vpop.f32.mrb[0].mxu0
    %458 = vdwg.mxu0
    %v459 = vmax.f32 %v454, 0.0
    %v460 = vpack.c.bf16 %v459, %v459
    %v461 = vld [vmem:[#allocation10] sm:$0xf]
    %v462 = vld [vmem:[#allocation10 + $0x4] sm:$0xf]
    %v463 = vld [vmem:[#allocation10 + $0x8] sm:$0xf]
    %v464 = vld [vmem:[#allocation10 + $0xc] sm:$0xf]
    %v465 = vld [vmem:[#allocation10 + $0x10] sm:$0xf]
    %v466 = vld [vmem:[#allocation10 + $0x14] sm:$0xf]
    %v467 = vld [vmem:[#allocation10 + $0x18] sm:$0xf]
    %v468 = vld [vmem:[#allocation10 + $0x1c] sm:$0xf]
    %v469 = vld [vmem:[#allocation10 + $0x20] sm:$0xf]
    %v470 = vld [vmem:[#allocation10 + $0x24] sm:$0xf]
    %v471 = vld [vmem:[#allocation10 + $0x28] sm:$0xf]
    %v472 = vld [vmem:[#allocation10 + $0x2c] sm:$0xf]
    %v473 = vld [vmem:[#allocation10 + $0x30] sm:$0xf]
    %v474 = vld [vmem:[#allocation10 + $0x34] sm:$0xf]
    %v475 = vld [vmem:[#allocation10 + $0x38] sm:$0xf]
    %v476 = vld [vmem:[#allocation10 + $0x3c] sm:$0xf]
    %v477 = vld [vmem:[%s8] sm:$0x1]
    %v479 = vlaneseq
    %v480 = vshrl.u32 %v479, 7
    %v481 = vsub.s32 0, %v480
    %v482 = vrot.slane %v477, %v481
    %v500 = vunpack.c.l.b16 %v461
    %v501 = vunpack.c.l.b16 %v462
    %v502 = vunpack.c.l.b16 %v463
    %v503 = vunpack.c.l.b16 %v464
    %v504 = vunpack.c.l.b16 %v465
    %v505 = vunpack.c.l.b16 %v466
    %v506 = vunpack.c.l.b16 %v467
    %v507 = vunpack.c.l.b16 %v468
    %v508 = vunpack.c.l.b16 %v469
    %v509 = vunpack.c.l.b16 %v470
    %v510 = vunpack.c.l.b16 %v471
    %v511 = vunpack.c.l.b16 %v472
    %v512 = vunpack.c.l.b16 %v473
    %v513 = vunpack.c.l.b16 %v474
    %v514 = vunpack.c.l.b16 %v475
    %v515 = vunpack.c.l.b16 %v476
    %v516 = vpack.c.b16 %v501, %v500
    %v517 = vpack.c.b16 %v503, %v502
    %v518 = vpack.c.b16 %v505, %v504
    %v519 = vpack.c.b16 %v507, %v506
    %v520 = vpack.c.b16 %v509, %v508
    %v521 = vpack.c.b16 %v511, %v510
    %v522 = vpack.c.b16 %v513, %v512
    %v523 = vpack.c.b16 %v515, %v514
    %532 = vmatprep.subr.bf16.mxu0 0
    %533 = vmatpush1.bf16.msra.mxu0 %v516
    %534 = vmatprep.subr.bf16.mxu0 0
    %535 = vmatpush1.bf16.msra.mxu0 %v517
    %536 = vmatprep.subr.bf16.mxu0 0
    %537 = vmatpush1.bf16.msra.mxu0 %v518
    %538 = vmatprep.subr.bf16.mxu0 0
    %539 = vmatpush1.bf16.msra.mxu0 %v519
    %540 = vmatprep.subr.bf16.mxu0 0
    %541 = vmatpush1.bf16.msra.mxu0 %v520
    %542 = vmatprep.subr.bf16.mxu0 0
    %543 = vmatpush1.bf16.msra.mxu0 %v521
    %544 = vmatprep.subr.bf16.mxu0 0
    %545 = vmatpush1.bf16.msra.mxu0 %v522
    %546 = vmatprep.subr.bf16.mxu0 0
    %547 = vmatpush1.bf16.msra.mxu0 %v523
    %548 = vmatprep.subr.bf16.mxu0 0
    %549 = vmatpush1.bf16.msra.mxu0 0
    %550 = vmatprep.subr.bf16.mxu0 0
    %551 = vmatpush1.bf16.msra.mxu0 0
    %552 = vmatprep.subr.bf16.mxu0 0
    %553 = vmatpush1.bf16.msra.mxu0 0
    %554 = vmatprep.subr.bf16.mxu0 0
    %555 = vmatpush1.bf16.msra.mxu0 0
    %556 = vmatprep.subr.bf16.mxu0 0
    %557 = vmatpush1.bf16.msra.mxu0 0
    %558 = vmatprep.subr.bf16.mxu0 0
    %559 = vmatpush1.bf16.msra.mxu0 0
    %560 = vmatprep.subr.bf16.mxu0 0
    %561 = vmatpush1.bf16.msra.mxu0 0
    %562 = vmatprep.subr.bf16.mxu0 0
    %563 = vmatpush1.bf16.msra.mxu0 0
    %564 = vmatprep.mubr.bf16.mxu0 0
    %565 = vmatmul.mubr.bf16.gmra.mrb[0].mxu0 %v460
    %v566 = vpop.f32.mrb[0].mxu0
    %v567 = vadd.f32 %v482, %v566
    %v568 = vpop.f32.mrb[0].mxu0
    %v569 = vpop.f32.mrb[0].mxu0
    %v570 = vpop.f32.mrb[0].mxu0
    %571 = vdwg.mxu0
    %v572 = vmax.f32 %v567, 0.0
    %v573 = vpack.c.bf16 %v572, %v572
    %v574 = vld [vmem:[#allocation11] sm:$0xf]
    %v575 = vld [vmem:[#allocation11 + $0x4] sm:$0xf]
    %v576 = vld [vmem:[#allocation11 + $0x8] sm:$0xf]
    %v577 = vld [vmem:[#allocation11 + $0xc] sm:$0xf]
    %v578 = vld [vmem:[#allocation11 + $0x10] sm:$0xf]
    %v579 = vld [vmem:[#allocation11 + $0x14] sm:$0xf]
    %v580 = vld [vmem:[#allocation11 + $0x18] sm:$0xf]
    %v581 = vld [vmem:[#allocation11 + $0x1c] sm:$0xf]
    %v582 = vld [vmem:[#allocation11 + $0x20] sm:$0xf]
    %v583 = vld [vmem:[#allocation11 + $0x24] sm:$0xf]
    %v584 = vld [vmem:[#allocation11 + $0x28] sm:$0xf]
    %v585 = vld [vmem:[#allocation11 + $0x2c] sm:$0xf]
    %v586 = vld [vmem:[#allocation11 + $0x30] sm:$0xf]
    %v587 = vld [vmem:[#allocation11 + $0x34] sm:$0xf]
    %v588 = vld [vmem:[#allocation11 + $0x38] sm:$0xf]
    %v589 = vld [vmem:[#allocation11 + $0x3c] sm:$0xf]
    %v590 = vld [vmem:[%s10] sm:$0x1]
    %v592 = vlaneseq
    %v593 = vshrl.u32 %v592, 7
    %v594 = vsub.s32 0, %v593
    %v595 = vrot.slane %v590, %v594
    %v613 = vunpack.c.l.b16 %v574
    %v614 = vunpack.c.l.b16 %v575
    %v615 = vunpack.c.l.b16 %v576
    %v616 = vunpack.c.l.b16 %v577
    %v617 = vunpack.c.l.b16 %v578
    %v618 = vunpack.c.l.b16 %v579
    %v619 = vunpack.c.l.b16 %v580
    %v620 = vunpack.c.l.b16 %v581
    %v621 = vunpack.c.l.b16 %v582
    %v622 = vunpack.c.l.b16 %v583
    %v623 = vunpack.c.l.b16 %v584
    %v624 = vunpack.c.l.b16 %v585
    %v625 = vunpack.c.l.b16 %v586
    %v626 = vunpack.c.l.b16 %v587
    %v627 = vunpack.c.l.b16 %v588
    %v628 = vunpack.c.l.b16 %v589
    %v629 = vpack.c.b16 %v614, %v613
    %v630 = vpack.c.b16 %v616, %v615
    %v631 = vpack.c.b16 %v618, %v617
    %v632 = vpack.c.b16 %v620, %v619
    %v633 = vpack.c.b16 %v622, %v621
    %v634 = vpack.c.b16 %v624, %v623
    %v635 = vpack.c.b16 %v626, %v625
    %v636 = vpack.c.b16 %v628, %v627
    %645 = vmatprep.subr.bf16.mxu0 0
    %646 = vmatpush1.bf16.msra.mxu0 %v629
    %647 = vmatprep.subr.bf16.mxu0 0
    %648 = vmatpush1.bf16.msra.mxu0 %v630
    %649 = vmatprep.subr.bf16.mxu0 0
    %650 = vmatpush1.bf16.msra.mxu0 %v631
    %651 = vmatprep.subr.bf16.mxu0 0
    %652 = vmatpush1.bf16.msra.mxu0 %v632
    %653 = vmatprep.subr.bf16.mxu0 0
    %654 = vmatpush1.bf16.msra.mxu0 %v633
    %655 = vmatprep.subr.bf16.mxu0 0
    %656 = vmatpush1.bf16.msra.mxu0 %v634
    %657 = vmatprep.subr.bf16.mxu0 0
    %658 = vmatpush1.bf16.msra.mxu0 %v635
    %659 = vmatprep.subr.bf16.mxu0 0
    %660 = vmatpush1.bf16.msra.mxu0 %v636
    %661 = vmatprep.subr.bf16.mxu0 0
    %662 = vmatpush1.bf16.msra.mxu0 0
    %663 = vmatprep.subr.bf16.mxu0 0
    %664 = vmatpush1.bf16.msra.mxu0 0
    %665 = vmatprep.subr.bf16.mxu0 0
    %666 = vmatpush1.bf16.msra.mxu0 0
    %667 = vmatprep.subr.bf16.mxu0 0
    %668 = vmatpush1.bf16.msra.mxu0 0
    %669 = vmatprep.subr.bf16.mxu0 0
    %670 = vmatpush1.bf16.msra.mxu0 0
    %671 = vmatprep.subr.bf16.mxu0 0
    %672 = vmatpush1.bf16.msra.mxu0 0
    %673 = vmatprep.subr.bf16.mxu0 0
    %674 = vmatpush1.bf16.msra.mxu0 0
    %675 = vmatprep.subr.bf16.mxu0 0
    %676 = vmatpush1.bf16.msra.mxu0 0
    %677 = vmatprep.mubr.bf16.mxu0 0
    %678 = vmatmul.mubr.bf16.gmra.mrb[0].mxu0 %v573
    %v679 = vpop.f32.mrb[0].mxu0
    %v680 = vadd.f32 %v595, %v679
    %v681 = vpop.f32.mrb[0].mxu0
    %v682 = vpop.f32.mrb[0].mxu0
    %v683 = vpop.f32.mrb[0].mxu0
    %684 = vdwg.mxu0
    %685 = vst [vmem:[#allocation13] sm:$0xff] %v680
    // Predicated region
    $region70: #{tpu_custom_call.1} parent=1 // pred_check
      _
    $region71: #{tpu_custom_call.1} parent=1 // pred_check_branch
      %687 = sbr.rel (0) target = $region73
    $region72: #{tpu_custom_call.1} parent=1 // pred_region
      %s689 = ssub.s32 128, 128
      %690 = vsyncadd [#allocation4], %s689
      %s692 = sshll.u32 [#allocation13], 4
      %s693 = int_to_ptr.vmem [resolvable:$true] %s692
      %695 = dma.vmem_to_hbm [thread:$0]  %s693, 128, %s11, [#allocation4]
    $region73: #{tpu_custom_call.1} parent=1 // pred_fallthru
      _
    // Predicated region
    $region74: #{tpu_custom_call.1} parent=1 // pred_check
      _
    $region75: #{tpu_custom_call.1} parent=1 // pred_check_branch
      %697 = sbr.rel (0) target = $region77
    $region76: #{tpu_custom_call.1} parent=1 // pred_region
      %698 = dma.done [#allocation4], 128
    $region77: #{tpu_custom_call.1} parent=1 // pred_fallthru
      _
    %699 = vsyncpa [#allocation3], 1
    %700 = vsyncpa [#allocation6], 1
    %701 = vsyncpa [#allocation9], 1
    %702 = vsyncpa [#allocation12], 1
    %703 = vsyncpa [#allocation4], 1

// kernel: tpu_custom_call.1
$region0: #{tpu_custom_call.1}
  #allocation0 [shape = 'u32[]', space=smem, size = 0x4, offset = 0x4, fixed_abs, tag = 'smem constant byte address 0x4 - core index']
  #allocation1 [shape = 'u32[144,128]{1,0:T(1,128)}', space=vmem, size = 0x12000, scoped, tag = 'internal scratch']
  %s0 = inlined_call_operand.hbm [shape: f32[8,128], index: 0, kind: input, shape index: {}]
  %s1 = inlined_call_operand.hbm [shape: bf16[128,128], index: 1, kind: input, shape index: {}]
  %s2 = inlined_call_operand.vmem [shape: f32[1,128], index: 2, kind: input, shape index: {}]
  %s3 = inlined_call_operand.hbm [shape: bf16[128,128], index: 3, kind: input, shape index: {}]
  %s4 = inlined_call_operand.vmem [shape: f32[1,128], index: 4, kind: input, shape index: {}]
  %s5 = inlined_call_operand.hbm [shape: bf16[128,128], index: 5, kind: input, shape index: {}]
  %s6 = inlined_call_operand.vmem [shape: f32[1,128], index: 6, kind: input, shape index: {}]
  %s7 = inlined_call_operand.hbm [shape: bf16[128,128], index: 7, kind: input, shape index: {}]
  %s8 = inlined_call_operand.vmem [shape: f32[1,128], index: 8, kind: input, shape index: {}]
  %s9 = inlined_call_operand.hbm [shape: bf16[128,128], index: 9, kind: input, shape index: {}]
  %s10 = inlined_call_operand.vmem [shape: f32[1,128], index: 10, kind: input, shape index: {}]
  %s11 = inlined_call_operand.hbm [shape: f32[8,128], index: 11, kind: output, shape index: {}]
  %s12 = sld [smem:[#allocation0]]
  $region78: #{tpu_custom_call.1} parent=0
    _
  %s14 = ssub.s32 1, %s12
  %s15 = scalar_select 0, %s14, %s12
  $region1: #{tpu_custom_call.1} parent=0
    #allocation2 [shape = 'u8[4096]{0}', space=vmem, size = 0x1000, scoped, tag = 'input window, operand 0, single buffered']
    #allocation3 [shape = 's32[1]{0}', space=sflag, size = 0x4, scoped, tag = 'scoped memory for tpu_custom_call.1']
    #allocation4 [shape = 's32[1]{0}', space=sflag, size = 0x4, scoped, tag = 'scoped memory for tpu_custom_call.1']
    #allocation5 [shape = 'u8[32768]{0}', space=vmem, size = 0x8000, scoped, tag = 'input window, operand 1, single buffered']
    #allocation6 [shape = 's32[1]{0}', space=sflag, size = 0x4, scoped, tag = 'scoped memory for tpu_custom_call.1']
    #allocation7 [shape = 'u8[32768]{0}', space=vmem, size = 0x8000, scoped, tag = 'input window, operand 3, single buffered']
    #allocation8 [shape = 'u8[32768]{0}', space=vmem, size = 0x8000, scoped, tag = 'input window, operand 5, single buffered']
    #allocation9 [shape = 's32[1]{0}', space=sflag, size = 0x4, scoped, tag = 'scoped memory for tpu_custom_call.1']
    #allocation10 [shape = 'u8[32768]{0}', space=vmem, size = 0x8000, scoped, tag = 'input window, operand 7, single buffered']
    #allocation11 [shape = 'u8[32768]{0}', space=vmem, size = 0x8000, scoped, tag = 'input window, operand 9, single buffered']
    #allocation12 [shape = 's32[1]{0}', space=sflag, size = 0x4, scoped, tag = 'scoped memory for tpu_custom_call.1']
    #allocation13 [shape = 'u8[4096]{0}', space=vmem, size = 0x1000, scoped, tag = 'output window, operand 0, single buffered']
    %16 = vsyncpa [#allocation3], 0
    %17 = vsyncpa [#allocation6], 0
    %18 = vsyncpa [#allocation9], 0
    %19 = vsyncpa [#allocation12], 0
    %20 = vsyncpa [#allocation4], 0
    // Predicated region
    $region2: #{tpu_custom_call.1} parent=1 // pred_check
      _
    $region3: #{tpu_custom_call.1} parent=1 // pred_check_branch
      %22 = sbr.rel (0) target = $region5
    $region4: #{tpu_custom_call.1} parent=1 // pred_region
      %s24 = ssub.s32 128, 128
      %25 = vsyncadd [#allocation3], %s24
      %s27 = sshll.u32 [#allocation2], 4
      %s28 = int_to_ptr.vmem [resolvable:$true] %s27
      %30 = dma.hbm_to_vmem [thread:$0]  %s0, 128, %s28, [#allocation3]
    $region5: #{tpu_custom_call.1} parent=1 // pred_fallthru
      _
    // Predicated region
    $region6: #{tpu_custom_call.1} parent=1 // pred_check
      _
    $region7: #{tpu_custom_call.1} parent=1 // pred_check_branch
      %32 = sbr.rel (0) target = $region9
    $region8: #{tpu_custom_call.1} parent=1 // pred_region
      %s34 = ssub.s32 1024, 1024
      %35 = vsyncadd [#allocation6], %s34
      %s36 = sshll.u32 [#allocation5], 4
      %s37 = int_to_ptr.vmem [resolvable:$true] %s36
      %42 = dma.hbm_to_vmem [thread:$0]  %s1, 1024, %s37, [#allocation6], 64, 64, 4
    $region9: #{tpu_custom_call.1} parent=1 // pred_fallthru
      _
    // Predicated region
    $region10: #{tpu_custom_call.1} parent=1 // pred_check
      _
    $region11: #{tpu_custom_call.1} parent=1 // pred_check_branch
      %44 = sbr.rel (0) target = $region13
    $region12: #{tpu_custom_call.1} parent=1 // pred_region
      _
    $region13: #{tpu_custom_call.1} parent=1 // pred_fallthru
      _
    // Predicated region
    $region14: #{tpu_custom_call.1} parent=1 // pred_check
      _
    $region15: #{tpu_custom_call.1} parent=1 // pred_check_branch
      %46 = sbr.rel (0) target = $region17
    $region16: #{tpu_custom_call.1} parent=1 // pred_region
      %s48 = ssub.s32 1024, 1024
      %49 = vsyncadd [#allocation6], %s48
      %s50 = sshll.u32 [#allocation7], 4
      %s51 = int_to_ptr.vmem [resolvable:$true] %s50
      %56 = dma.hbm_to_vmem [thread:$0]  %s3, 1024, %s51, [#allocation6], 64, 64, 4
    $region17: #{tpu_custom_call.1} parent=1 // pred_fallthru
      _
    // Predicated region
    $region18: #{tpu_custom_call.1} parent=1 // pred_check
      _
    $region19: #{tpu_custom_call.1} parent=1 // pred_check_branch
      %58 = sbr.rel (0) target = $region21
    $region20: #{tpu_custom_call.1} parent=1 // pred_region
      _
    $region21: #{tpu_custom_call.1} parent=1 // pred_fallthru
      _
    // Predicated region
    $region22: #{tpu_custom_call.1} parent=1 // pred_check
      _
    $region23: #{tpu_custom_call.1} parent=1 // pred_check_branch
      %60 = sbr.rel (0) target = $region25
    $region24: #{tpu_custom_call.1} parent=1 // pred_region
      %s62 = ssub.s32 1024, 1024
      %63 = vsyncadd [#allocation9], %s62
      %s64 = sshll.u32 [#allocation8], 4
      %s65 = int_to_ptr.vmem [resolvable:$true] %s64
      %70 = dma.hbm_to_vmem [thread:$0]  %s5, 1024, %s65, [#allocation9], 64, 64, 4
    $region25: #{tpu_custom_call.1} parent=1 // pred_fallthru
      _
    // Predicated region
    $region26: #{tpu_custom_call.1} parent=1 // pred_check
      _
    $region27: #{tpu_custom_call.1} parent=1 // pred_check_branch
      %72 = sbr.rel (0) target = $region29
    $region28: #{tpu_custom_call.1} parent=1 // pred_region
      _
    $region29: #{tpu_custom_call.1} parent=1 // pred_fallthru
      _
    // Predicated region
    $region30: #{tpu_custom_call.1} parent=1 // pred_check
      _
    $region31: #{tpu_custom_call.1} parent=1 // pred_check_branch
      %74 = sbr.rel (0) target = $region33
    $region32: #{tpu_custom_call.1} parent=1 // pred_region
      %s76 = ssub.s32 1024, 1024
      %77 = vsyncadd [#allocation9], %s76
      %s78 = sshll.u32 [#allocation10], 4
      %s79 = int_to_ptr.vmem [resolvable:$true] %s78
      %84 = dma.hbm_to_vmem [thread:$0]  %s7, 1024, %s79, [#allocation9], 64, 64, 4
    $region33: #{tpu_custom_call.1} parent=1 // pred_fallthru
      _
    // Predicated region
    $region34: #{tpu_custom_call.1} parent=1 // pred_check
      _
    $region35: #{tpu_custom_call.1} parent=1 // pred_check_branch
      %86 = sbr.rel (0) target = $region37
    $region36: #{tpu_custom_call.1} parent=1 // pred_region
      _
    $region37: #{tpu_custom_call.1} parent=1 // pred_fallthru
      _
    // Predicated region
    $region38: #{tpu_custom_call.1} parent=1 // pred_check
      _
    $region39: #{tpu_custom_call.1} parent=1 // pred_check_branch
      %88 = sbr.rel (0) target = $region41
    $region40: #{tpu_custom_call.1} parent=1 // pred_region
      %s90 = ssub.s32 1024, 1024
      %91 = vsyncadd [#allocation12], %s90
      %s92 = sshll.u32 [#allocation11], 4
      %s93 = int_to_ptr.vmem [resolvable:$true] %s92
      %98 = dma.hbm_to_vmem [thread:$0]  %s9, 1024, %s93, [#allocation12], 64, 64, 4
    $region41: #{tpu_custom_call.1} parent=1 // pred_fallthru
      _
    // Predicated region
    $region42: #{tpu_custom_call.1} parent=1 // pred_check
      _
    $region43: #{tpu_custom_call.1} parent=1 // pred_check_branch
      %100 = sbr.rel (0) target = $region45
    $region44: #{tpu_custom_call.1} parent=1 // pred_region
      _
    $region45: #{tpu_custom_call.1} parent=1 // pred_fallthru
      _
    // Predicated region
    $region46: #{tpu_custom_call.1} parent=1 // pred_check
      _
    $region47: #{tpu_custom_call.1} parent=1 // pred_check_branch
      %102 = sbr.rel (0) target = $region49
    $region48: #{tpu_custom_call.1} parent=1 // pred_region
      %103 = dma.done [#allocation3], 128
    $region49: #{tpu_custom_call.1} parent=1 // pred_fallthru
      _
    // Predicated region
    $region50: #{tpu_custom_call.1} parent=1 // pred_check
      _
    $region51: #{tpu_custom_call.1} parent=1 // pred_check_branch
      %105 = sbr.rel (0) target = $region53
    $region52: #{tpu_custom_call.1} parent=1 // pred_region
      %106 = dma.done [#allocation6], 1024
    $region53: #{tpu_custom_call.1} parent=1 // pred_fallthru
      _
    // Predicated region
    $region54: #{tpu_custom_call.1} parent=1 // pred_check
      _
    $region55: #{tpu_custom_call.1} parent=1 // pred_check_branch
      %108 = sbr.rel (0) target = $region57
    $region56: #{tpu_custom_call.1} parent=1 // pred_region
      %109 = dma.done [#allocation6], 1024
    $region57: #{tpu_custom_call.1} parent=1 // pred_fallthru
      _
    // Predicated region
    $region58: #{tpu_custom_call.1} parent=1 // pred_check
      _
    $region59: #{tpu_custom_call.1} parent=1 // pred_check_branch
      %111 = sbr.rel (0) target = $region61
    $region60: #{tpu_custom_call.1} parent=1 // pred_region
      %112 = dma.done [#allocation9], 1024
    $region61: #{tpu_custom_call.1} parent=1 // pred_fallthru
      _
    // Predicated region
    $region62: #{tpu_custom_call.1} parent=1 // pred_check
      _
    $region63: #{tpu_custom_call.1} parent=1 // pred_check_branch
      %114 = sbr.rel (0) target = $region65
    $region64: #{tpu_custom_call.1} parent=1 // pred_region
      %115 = dma.done [#allocation9], 1024
    $region65: #{tpu_custom_call.1} parent=1 // pred_fallthru
      _
    // Predicated region
    $region66: #{tpu_custom_call.1} parent=1 // pred_check
      _
    $region67: #{tpu_custom_call.1} parent=1 // pred_check_branch
      %117 = sbr.rel (0) target = $region69
    $region68: #{tpu_custom_call.1} parent=1 // pred_region
      %118 = dma.done [#allocation12], 1024
    $region69: #{tpu_custom_call.1} parent=1 // pred_fallthru
      _
    %v120 = vld [vmem:[#allocation2] sm:$0xff]
    %v121 = vpack.c.bf16 %v120, %v120
    %v122 = vld [vmem:[#allocation5] sm:$0xf]
    %v123 = vld [vmem:[#allocation5 + $0x4] sm:$0xf]
    %v124 = vld [vmem:[#allocation5 + $0x8] sm:$0xf]
    %v125 = vld [vmem:[#allocation5 + $0xc] sm:$0xf]
    %v126 = vld [vmem:[#allocation5 + $0x10] sm:$0xf]
    %v127 = vld [vmem:[#allocation5 + $0x14] sm:$0xf]
    %v128 = vld [vmem:[#allocation5 + $0x18] sm:$0xf]
    %v129 = vld [vmem:[#allocation5 + $0x1c] sm:$0xf]
    %v130 = vld [vmem:[#allocation5 + $0x20] sm:$0xf]
    %v131 = vld [vmem:[#allocation5 + $0x24] sm:$0xf]
    %v132 = vld [vmem:[#allocation5 + $0x28] sm:$0xf]
    %v133 = vld [vmem:[#allocation5 + $0x2c] sm:$0xf]
    %v134 = vld [vmem:[#allocation5 + $0x30] sm:$0xf]
    %v135 = vld [vmem:[#allocation5 + $0x34] sm:$0xf]
    %v136 = vld [vmem:[#allocation5 + $0x38] sm:$0xf]
    %v137 = vld [vmem:[#allocation5 + $0x3c] sm:$0xf]
    %v138 = vld [vmem:[%s2] sm:$0x1]
    %v140 = vlaneseq
    %v141 = vshrl.u32 %v140, 7
    %v142 = vsub.s32 0, %v141
    %v143 = vrot.slane %v138, %v142
    %v161 = vunpack.c.l.b16 %v122
    %v162 = vunpack.c.l.b16 %v123
    %v163 = vunpack.c.l.b16 %v124
    %v164 = vunpack.c.l.b16 %v125
    %v165 = vunpack.c.l.b16 %v126
    %v166 = vunpack.c.l.b16 %v127
    %v167 = vunpack.c.l.b16 %v128
    %v168 = vunpack.c.l.b16 %v129
    %v169 = vunpack.c.l.b16 %v130
    %v170 = vunpack.c.l.b16 %v131
    %v171 = vunpack.c.l.b16 %v132
    %v172 = vunpack.c.l.b16 %v133
    %v173 = vunpack.c.l.b16 %v134
    %v174 = vunpack.c.l.b16 %v135
    %v175 = vunpack.c.l.b16 %v136
    %v176 = vunpack.c.l.b16 %v137
    %v177 = vpack.c.b16 %v162, %v161
    %v178 = vpack.c.b16 %v164, %v163
    %v179 = vpack.c.b16 %v166, %v165
    %v180 = vpack.c.b16 %v168, %v167
    %v181 = vpack.c.b16 %v170, %v169
    %v182 = vpack.c.b16 %v172, %v171
    %v183 = vpack.c.b16 %v174, %v173
    %v184 = vpack.c.b16 %v176, %v175
    %193 = vmatprep.subr.bf16.mxu0 0
    %194 = vmatpush1.bf16.msra.mxu0 %v177
    %195 = vmatprep.subr.bf16.mxu0 0
    %196 = vmatpush1.bf16.msra.mxu0 %v178
    %197 = vmatprep.subr.bf16.mxu0 0
    %198 = vmatpush1.bf16.msra.mxu0 %v179
    %199 = vmatprep.subr.bf16.mxu0 0
    %200 = vmatpush1.bf16.msra.mxu0 %v180
    %201 = vmatprep.subr.bf16.mxu0 0
    %202 = vmatpush1.bf16.msra.mxu0 %v181
    %203 = vmatprep.subr.bf16.mxu0 0
    %204 = vmatpush1.bf16.msra.mxu0 %v182
    %205 = vmatprep.subr.bf16.mxu0 0
    %206 = vmatpush1.bf16.msra.mxu0 %v183
    %207 = vmatprep.subr.bf16.mxu0 0
    %208 = vmatpush1.bf16.msra.mxu0 %v184
    %209 = vmatprep.subr.bf16.mxu0 0
    %210 = vmatpush1.bf16.msra.mxu0 0
    %211 = vmatprep.subr.bf16.mxu0 0
    %212 = vmatpush1.bf16.msra.mxu0 0
    %213 = vmatprep.subr.bf16.mxu0 0
    %214 = vmatpush1.bf16.msra.mxu0 0
    %215 = vmatprep.subr.bf16.mxu0 0
    %216 = vmatpush1.bf16.msra.mxu0 0
    %217 = vmatprep.subr.bf16.mxu0 0
    %218 = vmatpush1.bf16.msra.mxu0 0
    %219 = vmatprep.subr.bf16.mxu0 0
    %220 = vmatpush1.bf16.msra.mxu0 0
    %221 = vmatprep.subr.bf16.mxu0 0
    %222 = vmatpush1.bf16.msra.mxu0 0
    %223 = vmatprep.subr.bf16.mxu0 0
    %224 = vmatpush1.bf16.msra.mxu0 0
    %225 = vmatprep.mubr.bf16.mxu0 0
    %226 = vmatmul.mubr.bf16.gmra.mrb[0].mxu0 %v121
    %v227 = vpop.f32.mrb[0].mxu0
    %v228 = vadd.f32 %v143, %v227
    %v229 = vpop.f32.mrb[0].mxu0
    %v230 = vpop.f32.mrb[0].mxu0
    %v231 = vpop.f32.mrb[0].mxu0
    %232 = vdwg.mxu0
    %v233 = vmax.f32 %v228, 0.0
    %v234 = vpack.c.bf16 %v233, %v233
    %v235 = vld [vmem:[#allocation7] sm:$0xf]
    %v236 = vld [vmem:[#allocation7 + $0x4] sm:$0xf]
    %v237 = vld [vmem:[#allocation7 + $0x8] sm:$0xf]
    %v238 = vld [vmem:[#allocation7 + $0xc] sm:$0xf]
    %v239 = vld [vmem:[#allocation7 + $0x10] sm:$0xf]
    %v240 = vld [vmem:[#allocation7 + $0x14] sm:$0xf]
    %v241 = vld [vmem:[#allocation7 + $0x18] sm:$0xf]
    %v242 = vld [vmem:[#allocation7 + $0x1c] sm:$0xf]
    %v243 = vld [vmem:[#allocation7 + $0x20] sm:$0xf]
    %v244 = vld [vmem:[#allocation7 + $0x24] sm:$0xf]
    %v245 = vld [vmem:[#allocation7 + $0x28] sm:$0xf]
    %v246 = vld [vmem:[#allocation7 + $0x2c] sm:$0xf]
    %v247 = vld [vmem:[#allocation7 + $0x30] sm:$0xf]
    %v248 = vld [vmem:[#allocation7 + $0x34] sm:$0xf]
    %v249 = vld [vmem:[#allocation7 + $0x38] sm:$0xf]
    %v250 = vld [vmem:[#allocation7 + $0x3c] sm:$0xf]
    %v251 = vld [vmem:[%s4] sm:$0x1]
    %v253 = vlaneseq
    %v254 = vshrl.u32 %v253, 7
    %v255 = vsub.s32 0, %v254
    %v256 = vrot.slane %v251, %v255
    %v274 = vunpack.c.l.b16 %v235
    %v275 = vunpack.c.l.b16 %v236
    %v276 = vunpack.c.l.b16 %v237
    %v277 = vunpack.c.l.b16 %v238
    %v278 = vunpack.c.l.b16 %v239
    %v279 = vunpack.c.l.b16 %v240
    %v280 = vunpack.c.l.b16 %v241
    %v281 = vunpack.c.l.b16 %v242
    %v282 = vunpack.c.l.b16 %v243
    %v283 = vunpack.c.l.b16 %v244
    %v284 = vunpack.c.l.b16 %v245
    %v285 = vunpack.c.l.b16 %v246
    %v286 = vunpack.c.l.b16 %v247
    %v287 = vunpack.c.l.b16 %v248
    %v288 = vunpack.c.l.b16 %v249
    %v289 = vunpack.c.l.b16 %v250
    %v290 = vpack.c.b16 %v275, %v274
    %v291 = vpack.c.b16 %v277, %v276
    %v292 = vpack.c.b16 %v279, %v278
    %v293 = vpack.c.b16 %v281, %v280
    %v294 = vpack.c.b16 %v283, %v282
    %v295 = vpack.c.b16 %v285, %v284
    %v296 = vpack.c.b16 %v287, %v286
    %v297 = vpack.c.b16 %v289, %v288
    %306 = vmatprep.subr.bf16.mxu0 0
    %307 = vmatpush1.bf16.msra.mxu0 %v290
    %308 = vmatprep.subr.bf16.mxu0 0
    %309 = vmatpush1.bf16.msra.mxu0 %v291
    %310 = vmatprep.subr.bf16.mxu0 0
    %311 = vmatpush1.bf16.msra.mxu0 %v292
    %312 = vmatprep.subr.bf16.mxu0 0
    %313 = vmatpush1.bf16.msra.mxu0 %v293
    %314 = vmatprep.subr.bf16.mxu0 0
    %315 = vmatpush1.bf16.msra.mxu0 %v294
    %316 = vmatprep.subr.bf16.mxu0 0
    %317 = vmatpush1.bf16.msra.mxu0 %v295
    %318 = vmatprep.subr.bf16.mxu0 0
    %319 = vmatpush1.bf16.msra.mxu0 %v296
    %320 = vmatprep.subr.bf16.mxu0 0
    %321 = vmatpush1.bf16.msra.mxu0 %v297
    %322 = vmatprep.subr.bf16.mxu0 0
    %323 = vmatpush1.bf16.msra.mxu0 0
    %324 = vmatprep.subr.bf16.mxu0 0
    %325 = vmatpush1.bf16.msra.mxu0 0
    %326 = vmatprep.subr.bf16.mxu0 0
    %327 = vmatpush1.bf16.msra.mxu0 0
    %328 = vmatprep.subr.bf16.mxu0 0
    %329 = vmatpush1.bf16.msra.mxu0 0
    %330 = vmatprep.subr.bf16.mxu0 0
    %331 = vmatpush1.bf16.msra.mxu0 0
    %332 = vmatprep.subr.bf16.mxu0 0
    %333 = vmatpush1.bf16.msra.mxu0 0
    %334 = vmatprep.subr.bf16.mxu0 0
    %335 = vmatpush1.bf16.msra.mxu0 0
    %336 = vmatprep.subr.bf16.mxu0 0
    %337 = vmatpush1.bf16.msra.mxu0 0
    %338 = vmatprep.mubr.bf16.mxu0 0
    %339 = vmatmul.mubr.bf16.gmra.mrb[0].mxu0 %v234
    %v340 = vpop.f32.mrb[0].mxu0
    %v341 = vadd.f32 %v256, %v340
    %v342 = vpop.f32.mrb[0].mxu0
    %v343 = vpop.f32.mrb[0].mxu0
    %v344 = vpop.f32.mrb[0].mxu0
    %345 = vdwg.mxu0
    %v346 = vmax.f32 %v341, 0.0
    %v347 = vpack.c.bf16 %v346, %v346
    %v348 = vld [vmem:[#allocation8] sm:$0xf]
    %v349 = vld [vmem:[#allocation8 + $0x4] sm:$0xf]
    %v350 = vld [vmem:[#allocation8 + $0x8] sm:$0xf]
    %v351 = vld [vmem:[#allocation8 + $0xc] sm:$0xf]
    %v352 = vld [vmem:[#allocation8 + $0x10] sm:$0xf]
    %v353 = vld [vmem:[#allocation8 + $0x14] sm:$0xf]
    %v354 = vld [vmem:[#allocation8 + $0x18] sm:$0xf]
    %v355 = vld [vmem:[#allocation8 + $0x1c] sm:$0xf]
    %v356 = vld [vmem:[#allocation8 + $0x20] sm:$0xf]
    %v357 = vld [vmem:[#allocation8 + $0x24] sm:$0xf]
    %v358 = vld [vmem:[#allocation8 + $0x28] sm:$0xf]
    %v359 = vld [vmem:[#allocation8 + $0x2c] sm:$0xf]
    %v360 = vld [vmem:[#allocation8 + $0x30] sm:$0xf]
    %v361 = vld [vmem:[#allocation8 + $0x34] sm:$0xf]
    %v362 = vld [vmem:[#allocation8 + $0x38] sm:$0xf]
    %v363 = vld [vmem:[#allocation8 + $0x3c] sm:$0xf]
    %v364 = vld [vmem:[%s6] sm:$0x1]
    %v366 = vlaneseq
    %v367 = vshrl.u32 %v366, 7
    %v368 = vsub.s32 0, %v367
    %v369 = vrot.slane %v364, %v368
    %v387 = vunpack.c.l.b16 %v348
    %v388 = vunpack.c.l.b16 %v349
    %v389 = vunpack.c.l.b16 %v350
    %v390 = vunpack.c.l.b16 %v351
    %v391 = vunpack.c.l.b16 %v352
    %v392 = vunpack.c.l.b16 %v353
    %v393 = vunpack.c.l.b16 %v354
    %v394 = vunpack.c.l.b16 %v355
    %v395 = vunpack.c.l.b16 %v356
    %v396 = vunpack.c.l.b16 %v357
    %v397 = vunpack.c.l.b16 %v358
    %v398 = vunpack.c.l.b16 %v359
    %v399 = vunpack.c.l.b16 %v360
    %v400 = vunpack.c.l.b16 %v361
    %v401 = vunpack.c.l.b16 %v362
    %v402 = vunpack.c.l.b16 %v363
    %v403 = vpack.c.b16 %v388, %v387
    %v404 = vpack.c.b16 %v390, %v389
    %v405 = vpack.c.b16 %v392, %v391
    %v406 = vpack.c.b16 %v394, %v393
    %v407 = vpack.c.b16 %v396, %v395
    %v408 = vpack.c.b16 %v398, %v397
    %v409 = vpack.c.b16 %v400, %v399
    %v410 = vpack.c.b16 %v402, %v401
    %419 = vmatprep.subr.bf16.mxu0 0
    %420 = vmatpush1.bf16.msra.mxu0 %v403
    %421 = vmatprep.subr.bf16.mxu0 0
    %422 = vmatpush1.bf16.msra.mxu0 %v404
    %423 = vmatprep.subr.bf16.mxu0 0
    %424 = vmatpush1.bf16.msra.mxu0 %v405
    %425 = vmatprep.subr.bf16.mxu0 0
    %426 = vmatpush1.bf16.msra.mxu0 %v406
    %427 = vmatprep.subr.bf16.mxu0 0
    %428 = vmatpush1.bf16.msra.mxu0 %v407
    %429 = vmatprep.subr.bf16.mxu0 0
    %430 = vmatpush1.bf16.msra.mxu0 %v408
    %431 = vmatprep.subr.bf16.mxu0 0
    %432 = vmatpush1.bf16.msra.mxu0 %v409
    %433 = vmatprep.subr.bf16.mxu0 0
    %434 = vmatpush1.bf16.msra.mxu0 %v410
    %435 = vmatprep.subr.bf16.mxu0 0
    %436 = vmatpush1.bf16.msra.mxu0 0
    %437 = vmatprep.subr.bf16.mxu0 0
    %438 = vmatpush1.bf16.msra.mxu0 0
    %439 = vmatprep.subr.bf16.mxu0 0
    %440 = vmatpush1.bf16.msra.mxu0 0
    %441 = vmatprep.subr.bf16.mxu0 0
    %442 = vmatpush1.bf16.msra.mxu0 0
    %443 = vmatprep.subr.bf16.mxu0 0
    %444 = vmatpush1.bf16.msra.mxu0 0
    %445 = vmatprep.subr.bf16.mxu0 0
    %446 = vmatpush1.bf16.msra.mxu0 0
    %447 = vmatprep.subr.bf16.mxu0 0
    %448 = vmatpush1.bf16.msra.mxu0 0
    %449 = vmatprep.subr.bf16.mxu0 0
    %450 = vmatpush1.bf16.msra.mxu0 0
    %451 = vmatprep.mubr.bf16.mxu0 0
    %452 = vmatmul.mubr.bf16.gmra.mrb[0].mxu0 %v347
    %v453 = vpop.f32.mrb[0].mxu0
    %v454 = vadd.f32 %v369, %v453
    %v455 = vpop.f32.mrb[0].mxu0
    %v456 = vpop.f32.mrb[0].mxu0
    %v457 = vpop.f32.mrb[0].mxu0
    %458 = vdwg.mxu0
    %v459 = vmax.f32 %v454, 0.0
    %v460 = vpack.c.bf16 %v459, %v459
    %v461 = vld [vmem:[#allocation10] sm:$0xf]
    %v462 = vld [vmem:[#allocation10 + $0x4] sm:$0xf]
    %v463 = vld [vmem:[#allocation10 + $0x8] sm:$0xf]
    %v464 = vld [vmem:[#allocation10 + $0xc] sm:$0xf]
    %v465 = vld [vmem:[#allocation10 + $0x10] sm:$0xf]
    %v466 = vld [vmem:[#allocation10 + $0x14] sm:$0xf]
    %v467 = vld [vmem:[#allocation10 + $0x18] sm:$0xf]
    %v468 = vld [vmem:[#allocation10 + $0x1c] sm:$0xf]
    %v469 = vld [vmem:[#allocation10 + $0x20] sm:$0xf]
    %v470 = vld [vmem:[#allocation10 + $0x24] sm:$0xf]
    %v471 = vld [vmem:[#allocation10 + $0x28] sm:$0xf]
    %v472 = vld [vmem:[#allocation10 + $0x2c] sm:$0xf]
    %v473 = vld [vmem:[#allocation10 + $0x30] sm:$0xf]
    %v474 = vld [vmem:[#allocation10 + $0x34] sm:$0xf]
    %v475 = vld [vmem:[#allocation10 + $0x38] sm:$0xf]
    %v476 = vld [vmem:[#allocation10 + $0x3c] sm:$0xf]
    %v477 = vld [vmem:[%s8] sm:$0x1]
    %v479 = vlaneseq
    %v480 = vshrl.u32 %v479, 7
    %v481 = vsub.s32 0, %v480
    %v482 = vrot.slane %v477, %v481
    %v500 = vunpack.c.l.b16 %v461
    %v501 = vunpack.c.l.b16 %v462
    %v502 = vunpack.c.l.b16 %v463
    %v503 = vunpack.c.l.b16 %v464
    %v504 = vunpack.c.l.b16 %v465
    %v505 = vunpack.c.l.b16 %v466
    %v506 = vunpack.c.l.b16 %v467
    %v507 = vunpack.c.l.b16 %v468
    %v508 = vunpack.c.l.b16 %v469
    %v509 = vunpack.c.l.b16 %v470
    %v510 = vunpack.c.l.b16 %v471
    %v511 = vunpack.c.l.b16 %v472
    %v512 = vunpack.c.l.b16 %v473
    %v513 = vunpack.c.l.b16 %v474
    %v514 = vunpack.c.l.b16 %v475
    %v515 = vunpack.c.l.b16 %v476
    %v516 = vpack.c.b16 %v501, %v500
    %v517 = vpack.c.b16 %v503, %v502
    %v518 = vpack.c.b16 %v505, %v504
    %v519 = vpack.c.b16 %v507, %v506
    %v520 = vpack.c.b16 %v509, %v508
    %v521 = vpack.c.b16 %v511, %v510
    %v522 = vpack.c.b16 %v513, %v512
    %v523 = vpack.c.b16 %v515, %v514
    %532 = vmatprep.subr.bf16.mxu0 0
    %533 = vmatpush1.bf16.msra.mxu0 %v516
    %534 = vmatprep.subr.bf16.mxu0 0
    %535 = vmatpush1.bf16.msra.mxu0 %v517
    %536 = vmatprep.subr.bf16.mxu0 0
    %537 = vmatpush1.bf16.msra.mxu0 %v518
    %538 = vmatprep.subr.bf16.mxu0 0
    %539 = vmatpush1.bf16.msra.mxu0 %v519
    %540 = vmatprep.subr.bf16.mxu0 0
    %541 = vmatpush1.bf16.msra.mxu0 %v520
    %542 = vmatprep.subr.bf16.mxu0 0
    %543 = vmatpush1.bf16.msra.mxu0 %v521
    %544 = vmatprep.subr.bf16.mxu0 0
    %545 = vmatpush1.bf16.msra.mxu0 %v522
    %546 = vmatprep.subr.bf16.mxu0 0
    %547 = vmatpush1.bf16.msra.mxu0 %v523
    %548 = vmatprep.subr.bf16.mxu0 0
    %549 = vmatpush1.bf16.msra.mxu0 0
    %550 = vmatprep.subr.bf16.mxu0 0
    %551 = vmatpush1.bf16.msra.mxu0 0
    %552 = vmatprep.subr.bf16.mxu0 0
    %553 = vmatpush1.bf16.msra.mxu0 0
    %554 = vmatprep.subr.bf16.mxu0 0
    %555 = vmatpush1.bf16.msra.mxu0 0
    %556 = vmatprep.subr.bf16.mxu0 0
    %557 = vmatpush1.bf16.msra.mxu0 0
    %558 = vmatprep.subr.bf16.mxu0 0
    %559 = vmatpush1.bf16.msra.mxu0 0
    %560 = vmatprep.subr.bf16.mxu0 0
    %561 = vmatpush1.bf16.msra.mxu0 0
    %562 = vmatprep.subr.bf16.mxu0 0
    %563 = vmatpush1.bf16.msra.mxu0 0
    %564 = vmatprep.mubr.bf16.mxu0 0
    %565 = vmatmul.mubr.bf16.gmra.mrb[0].mxu0 %v460
    %v566 = vpop.f32.mrb[0].mxu0
    %v567 = vadd.f32 %v482, %v566
    %v568 = vpop.f32.mrb[0].mxu0
    %v569 = vpop.f32.mrb[0].mxu0
    %v570 = vpop.f32.mrb[0].mxu0
    %571 = vdwg.mxu0
    %v572 = vmax.f32 %v567, 0.0
    %v573 = vpack.c.bf16 %v572, %v572
    %v574 = vld [vmem:[#allocation11] sm:$0xf]
    %v575 = vld [vmem:[#allocation11 + $0x4] sm:$0xf]
    %v576 = vld [vmem:[#allocation11 + $0x8] sm:$0xf]
    %v577 = vld [vmem:[#allocation11 + $0xc] sm:$0xf]
    %v578 = vld [vmem:[#allocation11 + $0x10] sm:$0xf]
    %v579 = vld [vmem:[#allocation11 + $0x14] sm:$0xf]
    %v580 = vld [vmem:[#allocation11 + $0x18] sm:$0xf]
    %v581 = vld [vmem:[#allocation11 + $0x1c] sm:$0xf]
    %v582 = vld [vmem:[#allocation11 + $0x20] sm:$0xf]
    %v583 = vld [vmem:[#allocation11 + $0x24] sm:$0xf]
    %v584 = vld [vmem:[#allocation11 + $0x28] sm:$0xf]
    %v585 = vld [vmem:[#allocation11 + $0x2c] sm:$0xf]
    %v586 = vld [vmem:[#allocation11 + $0x30] sm:$0xf]
    %v587 = vld [vmem:[#allocation11 + $0x34] sm:$0xf]
    %v588 = vld [vmem:[#allocation11 + $0x38] sm:$0xf]
    %v589 = vld [vmem:[#allocation11 + $0x3c] sm:$0xf]
    %v590 = vld [vmem:[%s10] sm:$0x1]
    %v592 = vlaneseq
    %v593 = vshrl.u32 %v592, 7
    %v594 = vsub.s32 0, %v593
    %v595 = vrot.slane %v590, %v594
    %v613 = vunpack.c.l.b16 %v574
    %v614 = vunpack.c.l.b16 %v575
    %v615 = vunpack.c.l.b16 %v576
    %v616 = vunpack.c.l.b16 %v577
    %v617 = vunpack.c.l.b16 %v578
    %v618 = vunpack.c.l.b16 %v579
    %v619 = vunpack.c.l.b16 %v580
    %v620 = vunpack.c.l.b16 %v581
    %v621 = vunpack.c.l.b16 %v582
    %v622 = vunpack.c.l.b16 %v583
    %v623 = vunpack.c.l.b16 %v584
    %v624 = vunpack.c.l.b16 %v585
    %v625 = vunpack.c.l.b16 %v586
    %v626 = vunpack.c.l.b16 %v587
    %v627 = vunpack.c.l.b16 %v588
    %v628 = vunpack.c.l.b16 %v589
    %v629 = vpack.c.b16 %v614, %v613
    %v630 = vpack.c.b16 %v616, %v615
    %v631 = vpack.c.b16 %v618, %v617
    %v632 = vpack.c.b16 %v620, %v619
    %v633 = vpack.c.b16 %v622, %v621
    %v634 = vpack.c.b16 %v624, %v623
    %v635 = vpack.c.b16 %v626, %v625
    %v636 = vpack.c.b16 %v628, %v627
    %645 = vmatprep.subr.bf16.mxu0 0
    %646 = vmatpush1.bf16.msra.mxu0 %v629
    %647 = vmatprep.subr.bf16.mxu0 0
    %648 = vmatpush1.bf16.msra.mxu0 %v630
    %649 = vmatprep.subr.bf16.mxu0 0
    %650 = vmatpush1.bf16.msra.mxu0 %v631
    %651 = vmatprep.subr.bf16.mxu0 0
    %652 = vmatpush1.bf16.msra.mxu0 %v632
    %653 = vmatprep.subr.bf16.mxu0 0
    %654 = vmatpush1.bf16.msra.mxu0 %v633
    %655 = vmatprep.subr.bf16.mxu0 0
    %656 = vmatpush1.bf16.msra.mxu0 %v634
    %657 = vmatprep.subr.bf16.mxu0 0
    %658 = vmatpush1.bf16.msra.mxu0 %v635
    %659 = vmatprep.subr.bf16.mxu0 0
    %660 = vmatpush1.bf16.msra.mxu0 %v636
    %661 = vmatprep.subr.bf16.mxu0 0
    %662 = vmatpush1.bf16.msra.mxu0 0
    %663 = vmatprep.subr.bf16.mxu0 0
    %664 = vmatpush1.bf16.msra.mxu0 0
    %665 = vmatprep.subr.bf16.mxu0 0
    %666 = vmatpush1.bf16.msra.mxu0 0
    %667 = vmatprep.subr.bf16.mxu0 0
    %668 = vmatpush1.bf16.msra.mxu0 0
    %669 = vmatprep.subr.bf16.mxu0 0
    %670 = vmatpush1.bf16.msra.mxu0 0
    %671 = vmatprep.subr.bf16.mxu0 0
    %672 = vmatpush1.bf16.msra.mxu0 0
    %673 = vmatprep.subr.bf16.mxu0 0
    %674 = vmatpush1.bf16.msra.mxu0 0
    %675 = vmatprep.subr.bf16.mxu0 0
    %676 = vmatpush1.bf16.msra.mxu0 0
    %677 = vmatprep.mubr.bf16.mxu0 0
    %678 = vmatmul.mubr.bf16.gmra.mrb[0].mxu0 %v573
    %v679 = vpop.f32.mrb[0].mxu0
    %v680 = vadd.f32 %v595, %v679
    %v681 = vpop.f32.mrb[0].mxu0
    %v682 = vpop.f32.mrb[0].mxu0
    %v683 = vpop.f32.mrb[0].mxu0
    %684 = vdwg.mxu0
    %685 = vst [vmem:[#allocation13] sm:$0xff] %v680
    // Predicated region
    $region70: #{tpu_custom_call.1} parent=1 // pred_check
      _
    $region71: #{tpu_custom_call.1} parent=1 // pred_check_branch
      %687 = sbr.rel (0) target = $region73
    $region72: #{tpu_custom_call.1} parent=1 // pred_region
      %s689 = ssub.s32 128, 128
      %690 = vsyncadd [#allocation4], %s689
      %s692 = sshll.u32 [#allocation13], 4
      %s693 = int_to_ptr.vmem [resolvable:$true] %s692
      %695 = dma.vmem_to_hbm [thread:$0]  %s693, 128, %s11, [#allocation4]
    $region73: #{tpu_custom_call.1} parent=1 // pred_fallthru
      _
    // Predicated region
    $region74: #{tpu_custom_call.1} parent=1 // pred_check
      _
    $region75: #{tpu_custom_call.1} parent=1 // pred_check_branch
      %697 = sbr.rel (0) target = $region77
    $region76: #{tpu_custom_call.1} parent=1 // pred_region
      %698 = dma.done [#allocation4], 128
    $region77: #{tpu_custom_call.1} parent=1 // pred_fallthru
      _
    %699 = vsyncpa [#allocation3], 1
    %700 = vsyncpa [#allocation6], 1
    %701 = vsyncpa [#allocation9], 1
    %702 = vsyncpa [#allocation12], 1
    %703 = vsyncpa [#allocation4], 1

</llo_original>
